<compile_context>
chip_gen: v7x
topology: tpu7x:2x2x1
jax: 0.10.0
libtpu: 0.0.40
codegen_flags: <defaults>
</compile_context>

<pallas_src>
import jax
import jax.numpy as jnp
from jax.experimental import pallas as pl
from jax.experimental.pallas import tpu as pltpu

EPS = 1e-5
VMEM_LIMIT = 32 * 1024 * 1024
CPAD = 128  # lane-dense width for the per-step channel-stats output


# ----------------------------------------------------------------------------
# Weight preprocessing (tiny, runs once per call in XLA on the weights only).
# ----------------------------------------------------------------------------
def _banded_weights(w_oihw, W):
    """OIHW (Cout, Cin, 3, 3) -> (3, W*Cin, W*Cout) block-Toeplitz matrices.

    M[kh, ws*Cin + ci, wd*Cout + co] = w[co, ci, kh, ws - wd + 1]
    for |ws - wd| <= 1, zero otherwise.  Multiplying a lane-dense row
    x_row[h'] (length W*Cin) by M[kh] applies all three kw taps at once and
    implements the W-direction zero padding via the band structure.
    """
    Cout, Cin, KH, KW = w_oihw.shape
    w_hwio = jnp.transpose(w_oihw, (2, 3, 1, 0)).astype(jnp.float32)  # (3,3,Cin,Cout)
    ws = jnp.arange(W)
    diff = ws[:, None] - ws[None, :]                      # ws - wd, (W, W)
    valid = (jnp.abs(diff) <= 1).astype(jnp.float32)
    kw_idx = jnp.clip(diff + 1, 0, KW - 1)                # (W, W)
    gathered = w_hwio[:, kw_idx]                          # (3, W, W, Cin, Cout)
    gathered = gathered * valid[None, :, :, None, None]
    m = jnp.transpose(gathered, (0, 1, 3, 2, 4)).reshape(KH, W * Cin, W * Cout)
    return m
    # TODO(synk): for large W or C switch to an im2col formulation (K = 9*Cin)
    # — band density is 3/W so the MXU does ~W/3x redundant FLOPs here.


def _channel_selector(W, C):
    """(W*C, CPAD) selector: P[w*C + c, c'] = 1 iff c == c' (c' < C)."""
    lane_c = jnp.arange(W * C) % C
    return (lane_c[:, None] == jnp.arange(CPAD)[None, :]).astype(jnp.float32)


def _tile_channels(vec, W):
    """(C,) per-channel vector -> (1, W*C) lane-dense layout."""
    return jnp.tile(vec.reshape(-1), W).reshape(1, -1)


def _pick_nb(N, H):
    """Images per grid step: fill the MXU M-dim (aim ~256 rows) while keeping
    the grid 2-way splittable (v7x megacore) when that keeps M >= 128."""
    divisors = [d for d in range(1, N + 1) if N % d == 0]
    target = max(1, 256 // H)
    nb = max([d for d in divisors if d <= target], default=1)
    if nb == N and N % 2 == 0 and (N // 2) * H >= 128:
        nb = N // 2
    return nb


# ----------------------------------------------------------------------------
# Conv kernel: [optional fused BN+ReLU of previous stage] -> 3x3 conv (banded
#              matmuls) -> raw conv output + per-step channel sum / sum-sq.
# ----------------------------------------------------------------------------
def _make_conv_kernel(pre_act, nb, H, WCin, WCout, out_dtype):
    M = nb * H

    def kernel(*refs):
        if pre_act:
            x_ref, m_ref, p_ref, sc_ref, sh_ref, y_ref, stats_ref = refs
        else:
            x_ref, m_ref, p_ref, y_ref, stats_ref = refs

        # (Nb, H, W*Cin) -> (Nb*H, W*Cin): large MXU M-dim, no relayout.
        x = x_ref[...].reshape(M, WCin).astype(jnp.float32)
        if pre_act:
            # BatchNorm (precomputed batch-stat scale/shift) + ReLU of the
            # previous stage, fused into this conv's load path (f32 math).
            x = jnp.maximum(x * sc_ref[...] + sh_ref[...], 0.0)

        # kh-1 / kh+1 input rows via XLU sublane rotates + a periodic row
        # mask: zeroes rows that wrap across image boundaries, which is
        # exactly the H-direction zero padding.
        h = jax.lax.broadcasted_iota(jnp.int32, (M, WCin), 0) % H
        x_m1 = jnp.where(h != 0, pltpu.roll(x, shift=1, axis=0), 0.0)
        x_p1 = jnp.where(h != H - 1, pltpu.roll(x, shift=M - 1, axis=0), 0.0)

        # Three MXU matmuls (K = W*Cin, N = W*Cout), f32 accumulation.
        # TODO(synk): on v6e/v7x the kh taps could be K-stacked into a single
        # (3*W*Cin)-deep matmul once the operand concat is relayout-free.
        acc = jnp.dot(x_m1.astype(jnp.bfloat16), m_ref[0],
                      preferred_element_type=jnp.float32)
        acc = acc + jnp.dot(x.astype(jnp.bfloat16), m_ref[1],
                            preferred_element_type=jnp.float32)
        acc = acc + jnp.dot(x_p1.astype(jnp.bfloat16), m_ref[2],
                            preferred_element_type=jnp.float32)

        y_ref[...] = acc.reshape(nb, H, WCout).astype(out_dtype)

        # Per-step channel stats via a (W*Cout, 128) selector matmul
        # (avoids a lane->sublane relayout; lane-dense 128-wide output).
        p = p_ref[...]
        sums = jnp.sum(jnp.dot(acc, p, preferred_element_type=jnp.float32),
                       axis=0, keepdims=True)
        sqs = jnp.sum(jnp.dot(acc * acc, p, preferred_element_type=jnp.float32),
                      axis=0, keepdims=True)
        stats_ref[...] = jnp.concatenate([sums, sqs], axis=0).reshape(1, 2, CPAD)

    return kernel


def _conv_banded(x_rows, m_banded, p_sel, scale_t=None, shift_t=None,
                 out_dtype=jnp.float32):
    """3x3 conv (+ optional fused BN+ReLU pre-activation) + per-step stats."""
    N, H, WCin = x_rows.shape
    WCout = m_banded.shape[-1]
    nb = _pick_nb(N, H)
    G = N // nb
    pre_act = scale_t is not None

    kernel = _make_conv_kernel(pre_act, nb, H, WCin, WCout, out_dtype)

    # TODO(synk): at larger W*C, single-buffer the constant-index operands
    # (m_banded, p_sel, scale/shift) to save VMEM headroom on v7x (64 MiB).
    in_specs = [
        pl.BlockSpec((nb, H, WCin), lambda n: (n, 0, 0)),
        pl.BlockSpec((3, WCin, WCout), lambda n: (0, 0, 0)),
        pl.BlockSpec((WCout, CPAD), lambda n: (0, 0)),
    ]
    args = [x_rows, m_banded, p_sel]
    if pre_act:
        in_specs += [pl.BlockSpec((1, WCin), lambda n: (0, 0)),
                     pl.BlockSpec((1, WCin), lambda n: (0, 0))]
        args += [scale_t, shift_t]

    in_bytes = jnp.dtype(x_rows.dtype).itemsize
    out_bytes = jnp.dtype(out_dtype).itemsize
    flops = 2 * N * H * WCin * WCout * 3 + 4 * N * H * WCout * CPAD
    bytes_accessed = (N * H * WCin * in_bytes + N * H * WCout * out_bytes
                      + 3 * WCin * WCout * 2 + WCout * CPAD * 4
                      + G * 2 * CPAD * 4 + (2 * WCin * 4 if pre_act else 0))

    return pl.pallas_call(
        kernel,
        out_shape=(
            jax.ShapeDtypeStruct((N, H, WCout), out_dtype),
            jax.ShapeDtypeStruct((G, 2, CPAD), jnp.float32),
        ),
        grid_spec=pltpu.PrefetchScalarGridSpec(
            num_scalar_prefetch=0,
            grid=(G,),
            in_specs=in_specs,
            out_specs=[
                pl.BlockSpec((nb, H, WCout), lambda n: (n, 0, 0)),
                pl.BlockSpec((1, 2, CPAD), lambda n: (n, 0, 0)),
            ],
        ),
        compiler_params=pltpu.CompilerParams(
            dimension_semantics=("parallel",),
            vmem_limit_bytes=VMEM_LIMIT),
        cost_estimate=pl.CostEstimate(
            flops=flops, transcendentals=0, bytes_accessed=bytes_accessed),
    )(*args)


# ----------------------------------------------------------------------------
# BatchNorm affine from per-step partial sums (training-mode batch stats).
# ----------------------------------------------------------------------------
def _bn_affine(stats, gamma, beta, count, C):
    s = jnp.sum(stats[:, 0, :C], axis=0)      # (C,)
    q = jnp.sum(stats[:, 1, :C], axis=0)      # (C,)
    mean = s / count
    var = q / count - mean * mean             # biased variance (PyTorch BN fwd)
    # TODO(synk): E[x^2]-mean^2 in f32; use a mean-shifted two-pass reduction
    # if tighter parity is needed when |mean| >> std.
    scale = gamma * jax.lax.rsqrt(var + EPS)
    shift = beta - mean * scale
    return scale, shift


# ----------------------------------------------------------------------------
# Public forward: PyTorch-style NCHW in / NCHW out.
# ----------------------------------------------------------------------------
@jax.jit
def double_conv_forward(x_nchw, w1_oihw, g1, b1, w2_oihw, g2, b2):
    N, Cin, H, W = x_nchw.shape
    Cmid = w1_oihw.shape[0]
    Cout = w2_oihw.shape[0]

    # NCHW -> lane-dense (N, H, W*Cin) rows (boundary layout change only).
    x_rows = (jnp.transpose(x_nchw, (0, 2, 3, 1))
              .reshape(N, H, W * Cin).astype(jnp.float32))

    m1 = _banded_weights(w1_oihw.astype(jnp.float32), W).astype(jnp.bfloat16)
    m2 = _banded_weights(w2_oihw.astype(jnp.float32), W).astype(jnp.bfloat16)
    p1 = _channel_selector(W, Cmid)
    p2 = _channel_selector(W, Cout)
    count = jnp.float32(N * H * W)

    # Stage 1: conv + batch stats; intermediate activation stored as bf16.
    y1, st1 = _conv_banded(x_rows, m1, p1, out_dtype=jnp.bfloat16)
    scale1, shift1 = _bn_affine(st1, g1.astype(jnp.float32),
                                b1.astype(jnp.float32), count, Cmid)

    # Stage 2: BN1 + ReLU fused into the conv's input path, then conv + stats.
    y2, st2 = _conv_banded(y1, m2, p2,
                           _tile_channels(scale1, W), _tile_channels(shift1, W),
                           out_dtype=jnp.float32)
    scale2, shift2 = _bn_affine(st2, g2.astype(jnp.float32),
                                b2.astype(jnp.float32), count, Cout)

    # Final BN2 + ReLU in plain jnp: XLA fuses it with the NCHW transpose.
    out = jnp.maximum(
        y2.reshape(N, H, W, Cout) * scale2.reshape(1, 1, 1, Cout)
        + shift2.reshape(1, 1, 1, Cout), 0.0)
    return jnp.transpose(out, (0, 3, 1, 2))


# ----------------------------------------------------------------------------
# Pure-JAX reference (PyTorch semantics, f32) for a sanity check.
# ----------------------------------------------------------------------------
def _reference(x_nchw, w1, g1, b1, w2, g2, b2):
    def stage(x, w, g, b):
        y = jax.lax.conv_general_dilated(
            x, w, window_strides=(1, 1), padding=((1, 1), (1, 1)),
            dimension_numbers=("NCHW", "OIHW", "NCHW"))
        mean = jnp.mean(y, axis=(0, 2, 3), keepdims=True)
        var = jnp.mean((y - mean) ** 2, axis=(0, 2, 3), keepdims=True)
        yn = (y - mean) / jnp.sqrt(var + EPS)
        yn = yn * g.reshape(1, -1, 1, 1) + b.reshape(1, -1, 1, 1)
        return jnp.maximum(yn, 0.0)
    return stage(stage(x_nchw, w1, g1, b1), w2, g2, b2)


if __name__ == "__main__":
    # DoubleConv(in_channels=4, out_channels=8) -> mid_channels = 8
    N, Cin, H, W = 2, 4, 16, 16
    Cmid, Cout = 8, 8

    keys = jax.random.split(jax.random.PRNGKey(0), 7)
    x = jax.random.normal(keys[0], (N, Cin, H, W), jnp.float32)
    w1 = 0.2 * jax.random.normal(keys[1], (Cmid, Cin, 3, 3), jnp.float32)   # OIHW
    w2 = 0.2 * jax.random.normal(keys[2], (Cout, Cmid, 3, 3), jnp.float32)  # OIHW
    g1 = 1.0 + 0.1 * jax.random.normal(keys[3], (Cmid,), jnp.float32)
    b1 = 0.1 * jax.random.normal(keys[4], (Cmid,), jnp.float32)
    g2 = 1.0 + 0.1 * jax.random.normal(keys[5], (Cout,), jnp.float32)
    b2 = 0.1 * jax.random.normal(keys[6], (Cout,), jnp.float32)

    out = double_conv_forward(x, w1, g1, b1, w2, g2, b2)
    out = jax.block_until_ready(out)

    ref = _reference(x, w1, g1, b1, w2, g2, b2)
    max_err = float(jnp.max(jnp.abs(out - ref)))
    assert out.shape == (N, Cout, H, W), out.shape
    assert max_err < 5e-2, f"max abs error too large: {max_err}"  # bf16 matmul tolerance
    print("KERNEL_OK")
</pallas_src>

<mosaic_0001>
module attributes {stable_mosaic.version = 11 : i64} {
  func.func @kernel(%arg0: i32, %arg1: memref<2x16x64xf32, #tpu.memory_space<vmem>>, %arg2: memref<3x64x128xbf16, #tpu.memory_space<vmem>>, %arg3: memref<128x128xf32, #tpu.memory_space<vmem>>, %arg4: memref<2x16x128xbf16, #tpu.memory_space<vmem>>, %arg5: memref<1x2x128xf32, #tpu.memory_space<vmem>>) attributes {dimension_semantics = [#tpu.dimension_semantics<parallel>], iteration_bounds = array<i64: 1>, scalar_prefetch = 0 : i64, scratch_operands = 0 : i64, tpu.core_type = #tpu.core_type<tc>, window_params = [{transform_indices = @transform_0, window_bounds = array<i64: 2, 16, 64>}, {pipeline_mode = #tpu.pipeline_mode<synchronous>, transform_indices = @transform_1, window_bounds = array<i64: 3, 64, 128>}, {pipeline_mode = #tpu.pipeline_mode<synchronous>, transform_indices = @transform_2, window_bounds = array<i64: 128, 128>}, {transform_indices = @transform_3, window_bounds = array<i64: 2, 16, 128>}, {transform_indices = @transform_4, window_bounds = array<i64: 1, 2, 128>}]} {
    %c0 = arith.constant 0 : index
    %c0_0 = arith.constant 0 : index
    %c0_1 = arith.constant 0 : index
    %0 = vector.load %arg1[%c0, %c0_0, %c0_1] : memref<2x16x64xf32, #tpu.memory_space<vmem>>, vector<2x16x64xf32>
    %1 = vector.shape_cast %0 : vector<2x16x64xf32> to vector<32x64xf32>
    %2 = tpu.iota {dimensions = array<i32: 0>} : vector<32x64xi32>
    %c16_i32 = arith.constant 16 : i32
    %c0_i32 = arith.constant 0 : i32
    %3 = arith.cmpi eq, %c16_i32, %c0_i32 : i32
    %c1_i32 = arith.constant 1 : i32
    %4 = arith.select %3, %c1_i32, %c16_i32 : i32
    %5 = vector.broadcast %4 : i32 to vector<32x64xi32>
    %6 = arith.remsi %2, %5 : vector<32x64xi32>
    %c0_i32_2 = arith.constant 0 : i32
    %7 = vector.broadcast %c0_i32_2 : i32 to vector<32x64xi32>
    %8 = arith.cmpi ne, %6, %7 : vector<32x64xi32>
    %c0_i32_3 = arith.constant 0 : i32
    %9 = vector.broadcast %c0_i32_3 : i32 to vector<32x64xi32>
    %10 = arith.cmpi slt, %6, %9 : vector<32x64xi32>
    %c0_i32_4 = arith.constant 0 : i32
    %11 = arith.cmpi slt, %4, %c0_i32_4 : i32
    %12 = vector.broadcast %11 : i1 to vector<32x64xi1>
    %13 = vector.broadcast %12 : vector<32x64xi1> to vector<32x64xi1>
    %14 = arith.xori %10, %13 : vector<32x64xi1>
    %15 = arith.andi %14, %8 : vector<32x64xi1>
    %16 = vector.broadcast %4 : i32 to vector<32x64xi32>
    %17 = arith.addi %6, %16 : vector<32x64xi32>
    %18 = arith.select %15, %17, %6 : vector<32x64xi1>, vector<32x64xi32>
    %c0_i32_5 = arith.constant 0 : i32
    %19 = vector.broadcast %c0_i32_5 : i32 to vector<32x64xi32>
    %20 = arith.cmpi ne, %18, %19 : vector<32x64xi32>
    %c1_i32_6 = arith.constant 1 : i32
    %21 = tpu.dynamic_rotate %1 by %c1_i32_6 dim 0 : vector<32x64xf32>, i32 -> vector<32x64xf32>
    %cst = arith.constant 0.000000e+00 : f32
    %22 = vector.broadcast %cst : f32 to vector<32x64xf32>
    %23 = arith.select %20, %21, %22 : vector<32x64xi1>, vector<32x64xf32>
    %c15_i32 = arith.constant 15 : i32
    %24 = vector.broadcast %c15_i32 : i32 to vector<32x64xi32>
    %25 = arith.cmpi ne, %18, %24 : vector<32x64xi32>
    %c31_i32 = arith.constant 31 : i32
    %26 = tpu.dynamic_rotate %1 by %c31_i32 dim 0 : vector<32x64xf32>, i32 -> vector<32x64xf32>
    %cst_7 = arith.constant 0.000000e+00 : f32
    %27 = vector.broadcast %cst_7 : f32 to vector<32x64xf32>
    %28 = arith.select %25, %26, %27 : vector<32x64xi1>, vector<32x64xf32>
    %29 = arith.truncf %23 : vector<32x64xf32> to vector<32x64xbf16>
    %c0_8 = arith.constant 0 : index
    %c0_9 = arith.constant 0 : index
    %c0_10 = arith.constant 0 : index
    %30 = vector.load %arg2[%c0_8, %c0_9, %c0_10] : memref<3x64x128xbf16, #tpu.memory_space<vmem>>, vector<1x64x128xbf16>
    %31 = vector.shape_cast %30 : vector<1x64x128xbf16> to vector<64x128xbf16>
    %cst_11 = arith.constant dense<0.000000e+00> : vector<32x128xf32>
    %32 = tpu.matmul %29, %31, %cst_11 {dimension_numbers = #tpu.dot_dimension_numbers<[1], [0], [0], [1], [0, 0, 1, 1], [], []>} : vector<32x64xbf16>, vector<64x128xbf16>, vector<32x128xf32> -> vector<32x128xf32>
    %33 = arith.truncf %1 : vector<32x64xf32> to vector<32x64xbf16>
    %c1 = arith.constant 1 : index
    %c0_12 = arith.constant 0 : index
    %c0_13 = arith.constant 0 : index
    %34 = vector.load %arg2[%c1, %c0_12, %c0_13] : memref<3x64x128xbf16, #tpu.memory_space<vmem>>, vector<1x64x128xbf16>
    %35 = vector.shape_cast %34 : vector<1x64x128xbf16> to vector<64x128xbf16>
    %cst_14 = arith.constant dense<0.000000e+00> : vector<32x128xf32>
    %36 = tpu.matmul %33, %35, %cst_14 {dimension_numbers = #tpu.dot_dimension_numbers<[1], [0], [0], [1], [0, 0, 1, 1], [], []>} : vector<32x64xbf16>, vector<64x128xbf16>, vector<32x128xf32> -> vector<32x128xf32>
    %37 = arith.addf %32, %36 : vector<32x128xf32>
    %38 = arith.truncf %28 : vector<32x64xf32> to vector<32x64xbf16>
    %c2 = arith.constant 2 : index
    %c0_15 = arith.constant 0 : index
    %c0_16 = arith.constant 0 : index
    %39 = vector.load %arg2[%c2, %c0_15, %c0_16] : memref<3x64x128xbf16, #tpu.memory_space<vmem>>, vector<1x64x128xbf16>
    %40 = vector.shape_cast %39 : vector<1x64x128xbf16> to vector<64x128xbf16>
    %cst_17 = arith.constant dense<0.000000e+00> : vector<32x128xf32>
    %41 = tpu.matmul %38, %40, %cst_17 {dimension_numbers = #tpu.dot_dimension_numbers<[1], [0], [0], [1], [0, 0, 1, 1], [], []>} : vector<32x64xbf16>, vector<64x128xbf16>, vector<32x128xf32> -> vector<32x128xf32>
    %42 = arith.addf %37, %41 : vector<32x128xf32>
    %43 = vector.shape_cast %42 : vector<32x128xf32> to vector<2x16x128xf32>
    %44 = arith.truncf %43 : vector<2x16x128xf32> to vector<2x16x128xbf16>
    %c0_18 = arith.constant 0 : index
    %c0_19 = arith.constant 0 : index
    %c0_20 = arith.constant 0 : index
    %45 = vector.load %arg4[%c0_18, %c0_19, %c0_20] : memref<2x16x128xbf16, #tpu.memory_space<vmem>>, vector<2x16x128xbf16>
    tpu.vector_store %arg4[%c0_18, %c0_19, %c0_20], %44 {strides = array<i32>} : memref<2x16x128xbf16, #tpu.memory_space<vmem>>, vector<2x16x128xbf16>,
    %c0_21 = arith.constant 0 : index
    %c0_22 = arith.constant 0 : index
    %46 = vector.load %arg3[%c0_21, %c0_22] : memref<128x128xf32, #tpu.memory_space<vmem>>, vector<128x128xf32>
    %cst_23 = arith.constant dense<0.000000e+00> : vector<32x128xf32>
    %47 = tpu.matmul %42, %46, %cst_23 {dimension_numbers = #tpu.dot_dimension_numbers<[1], [0], [0], [1], [0, 0, 1, 1], [], []>} : vector<32x128xf32>, vector<128x128xf32>, vector<32x128xf32> -> vector<32x128xf32>
    %cst_24 = arith.constant dense<0.000000e+00> : vector<128xf32>
    %48 = vector.multi_reduction <add>, %47, %cst_24 [0] : vector<32x128xf32> to vector<128xf32>
    %49 = vector.shape_cast %48 : vector<128xf32> to vector<1x128xf32>
    %50 = arith.mulf %42, %42 : vector<32x128xf32>
    %cst_25 = arith.constant dense<0.000000e+00> : vector<32x128xf32>
    %51 = tpu.matmul %50, %46, %cst_25 {dimension_numbers = #tpu.dot_dimension_numbers<[1], [0], [0], [1], [0, 0, 1, 1], [], []>} : vector<32x128xf32>, vector<128x128xf32>, vector<32x128xf32> -> vector<32x128xf32>
    %cst_26 = arith.constant dense<0.000000e+00> : vector<128xf32>
    %52 = vector.multi_reduction <add>, %51, %cst_26 [0] : vector<32x128xf32> to vector<128xf32>
    %53 = vector.shape_cast %52 : vector<128xf32> to vector<1x128xf32>
    %54 = tpu.concatenate %49, %53 in 0 : vector<1x128xf32>, vector<1x128xf32> -> vector<2x128xf32>
    %55 = vector.shape_cast %54 : vector<2x128xf32> to vector<1x2x128xf32>
    %c0_27 = arith.constant 0 : index
    %c0_28 = arith.constant 0 : index
    %c0_29 = arith.constant 0 : index
    %56 = vector.load %arg5[%c0_27, %c0_28, %c0_29] : memref<1x2x128xf32, #tpu.memory_space<vmem>>, vector<1x2x128xf32>
    tpu.vector_store %arg5[%c0_27, %c0_28, %c0_29], %55 {strides = array<i32>} : memref<1x2x128xf32, #tpu.memory_space<vmem>>, vector<1x2x128xf32>,
    return
  }
  func.func @transform_0(%arg0: i32) -> (i32, i32, i32) {
    %c0_i32 = arith.constant 0 : i32
    %c0_i32_0 = arith.constant 0 : i32
    %c0_i32_1 = arith.constant 0 : i32
    return %arg0, %c0_i32, %c0_i32_0 : i32, i32, i32
  }
  func.func @transform_1(%arg0: i32) -> (i32, i32, i32) {
    %c0_i32 = arith.constant 0 : i32
    %c0_i32_0 = arith.constant 0 : i32
    %c0_i32_1 = arith.constant 0 : i32
    %c0_i32_2 = arith.constant 0 : i32
    return %c0_i32, %c0_i32_0, %c0_i32_1 : i32, i32, i32
  }
  func.func @transform_2(%arg0: i32) -> (i32, i32) {
    %c0_i32 = arith.constant 0 : i32
    %c0_i32_0 = arith.constant 0 : i32
    %c0_i32_1 = arith.constant 0 : i32
    return %c0_i32, %c0_i32_0 : i32, i32
  }
  func.func @transform_3(%arg0: i32) -> (i32, i32, i32) {
    %c0_i32 = arith.constant 0 : i32
    %c0_i32_0 = arith.constant 0 : i32
    %c0_i32_1 = arith.constant 0 : i32
    return %arg0, %c0_i32, %c0_i32_0 : i32, i32, i32
  }
  func.func @transform_4(%arg0: i32) -> (i32, i32, i32) {
    %c0_i32 = arith.constant 0 : i32
    %c0_i32_0 = arith.constant 0 : i32
    %c0_i32_1 = arith.constant 0 : i32
    return %arg0, %c0_i32, %c0_i32_0 : i32, i32, i32
  }
}

module attributes {stable_mosaic.version = 11 : i64} {
  func.func @kernel(%arg0: i32, %arg1: memref<2x16x128xbf16, #tpu.memory_space<vmem>>, %arg2: memref<3x128x128xbf16, #tpu.memory_space<vmem>>, %arg3: memref<128x128xf32, #tpu.memory_space<vmem>>, %arg4: memref<1x128xf32, #tpu.memory_space<vmem>>, %arg5: memref<1x128xf32, #tpu.memory_space<vmem>>, %arg6: memref<2x16x128xf32, #tpu.memory_space<vmem>>, %arg7: memref<1x2x128xf32, #tpu.memory_space<vmem>>) attributes {dimension_semantics = [#tpu.dimension_semantics<parallel>], iteration_bounds = array<i64: 1>, scalar_prefetch = 0 : i64, scratch_operands = 0 : i64, tpu.core_type = #tpu.core_type<tc>, window_params = [{transform_indices = @transform_0, window_bounds = array<i64: 2, 16, 128>}, {pipeline_mode = #tpu.pipeline_mode<synchronous>, transform_indices = @transform_1, window_bounds = array<i64: 3, 128, 128>}, {pipeline_mode = #tpu.pipeline_mode<synchronous>, transform_indices = @transform_2, window_bounds = array<i64: 128, 128>}, {pipeline_mode = #tpu.pipeline_mode<synchronous>, transform_indices = @transform_3, window_bounds = array<i64: 1, 128>}, {pipeline_mode = #tpu.pipeline_mode<synchronous>, transform_indices = @transform_4, window_bounds = array<i64: 1, 128>}, {transform_indices = @transform_5, window_bounds = array<i64: 2, 16, 128>}, {transform_indices = @transform_6, window_bounds = array<i64: 1, 2, 128>}]} {
    %c0 = arith.constant 0 : index
    %c0_0 = arith.constant 0 : index
    %c0_1 = arith.constant 0 : index
    %0 = vector.load %arg1[%c0, %c0_0, %c0_1] : memref<2x16x128xbf16, #tpu.memory_space<vmem>>, vector<2x16x128xbf16>
    %1 = vector.shape_cast %0 : vector<2x16x128xbf16> to vector<32x128xbf16>
    %2 = arith.extf %1 : vector<32x128xbf16> to vector<32x128xf32>
    %c0_2 = arith.constant 0 : index
    %c0_3 = arith.constant 0 : index
    %3 = vector.load %arg4[%c0_2, %c0_3] : memref<1x128xf32, #tpu.memory_space<vmem>>, vector<1x128xf32>
    %4 = vector.broadcast %3 : vector<1x128xf32> to vector<32x128xf32>
    %5 = arith.mulf %2, %4 : vector<32x128xf32>
    %c0_4 = arith.constant 0 : index
    %c0_5 = arith.constant 0 : index
    %6 = vector.load %arg5[%c0_4, %c0_5] : memref<1x128xf32, #tpu.memory_space<vmem>>, vector<1x128xf32>
    %7 = vector.broadcast %6 : vector<1x128xf32> to vector<32x128xf32>
    %8 = arith.addf %5, %7 : vector<32x128xf32>
    %cst = arith.constant 0.000000e+00 : f32
    %9 = vector.broadcast %cst : f32 to vector<32x128xf32>
    %10 = arith.maximumf %8, %9 : vector<32x128xf32>
    %11 = tpu.iota {dimensions = array<i32: 0>} : vector<32x128xi32>
    %c16_i32 = arith.constant 16 : i32
    %c0_i32 = arith.constant 0 : i32
    %12 = arith.cmpi eq, %c16_i32, %c0_i32 : i32
    %c1_i32 = arith.constant 1 : i32
    %13 = arith.select %12, %c1_i32, %c16_i32 : i32
    %14 = vector.broadcast %13 : i32 to vector<32x128xi32>
    %15 = arith.remsi %11, %14 : vector<32x128xi32>
    %c0_i32_6 = arith.constant 0 : i32
    %16 = vector.broadcast %c0_i32_6 : i32 to vector<32x128xi32>
    %17 = arith.cmpi ne, %15, %16 : vector<32x128xi32>
    %c0_i32_7 = arith.constant 0 : i32
    %18 = vector.broadcast %c0_i32_7 : i32 to vector<32x128xi32>
    %19 = arith.cmpi slt, %15, %18 : vector<32x128xi32>
    %c0_i32_8 = arith.constant 0 : i32
    %20 = arith.cmpi slt, %13, %c0_i32_8 : i32
    %21 = vector.broadcast %20 : i1 to vector<32x128xi1>
    %22 = vector.broadcast %21 : vector<32x128xi1> to vector<32x128xi1>
    %23 = arith.xori %19, %22 : vector<32x128xi1>
    %24 = arith.andi %23, %17 : vector<32x128xi1>
    %25 = vector.broadcast %13 : i32 to vector<32x128xi32>
    %26 = arith.addi %15, %25 : vector<32x128xi32>
    %27 = arith.select %24, %26, %15 : vector<32x128xi1>, vector<32x128xi32>
    %c0_i32_9 = arith.constant 0 : i32
    %28 = vector.broadcast %c0_i32_9 : i32 to vector<32x128xi32>
    %29 = arith.cmpi ne, %27, %28 : vector<32x128xi32>
    %c1_i32_10 = arith.constant 1 : i32
    %30 = tpu.dynamic_rotate %10 by %c1_i32_10 dim 0 : vector<32x128xf32>, i32 -> vector<32x128xf32>
    %cst_11 = arith.constant 0.000000e+00 : f32
    %31 = vector.broadcast %cst_11 : f32 to vector<32x128xf32>
    %32 = arith.select %29, %30, %31 : vector<32x128xi1>, vector<32x128xf32>
    %c15_i32 = arith.constant 15 : i32
    %33 = vector.broadcast %c15_i32 : i32 to vector<32x128xi32>
    %34 = arith.cmpi ne, %27, %33 : vector<32x128xi32>
    %c31_i32 = arith.constant 31 : i32
    %35 = tpu.dynamic_rotate %10 by %c31_i32 dim 0 : vector<32x128xf32>, i32 -> vector<32x128xf32>
    %cst_12 = arith.constant 0.000000e+00 : f32
    %36 = vector.broadcast %cst_12 : f32 to vector<32x128xf32>
    %37 = arith.select %34, %35, %36 : vector<32x128xi1>, vector<32x128xf32>
    %38 = arith.truncf %32 : vector<32x128xf32> to vector<32x128xbf16>
    %c0_13 = arith.constant 0 : index
    %c0_14 = arith.constant 0 : index
    %c0_15 = arith.constant 0 : index
    %39 = vector.load %arg2[%c0_13, %c0_14, %c0_15] : memref<3x128x128xbf16, #tpu.memory_space<vmem>>, vector<1x128x128xbf16>
    %40 = vector.shape_cast %39 : vector<1x128x128xbf16> to vector<128x128xbf16>
    %cst_16 = arith.constant dense<0.000000e+00> : vector<32x128xf32>
    %41 = tpu.matmul %38, %40, %cst_16 {dimension_numbers = #tpu.dot_dimension_numbers<[1], [0], [0], [1], [0, 0, 1, 1], [], []>} : vector<32x128xbf16>, vector<128x128xbf16>, vector<32x128xf32> -> vector<32x128xf32>
    %42 = arith.truncf %10 : vector<32x128xf32> to vector<32x128xbf16>
    %c1 = arith.constant 1 : index
    %c0_17 = arith.constant 0 : index
    %c0_18 = arith.constant 0 : index
    %43 = vector.load %arg2[%c1, %c0_17, %c0_18] : memref<3x128x128xbf16, #tpu.memory_space<vmem>>, vector<1x128x128xbf16>
    %44 = vector.shape_cast %43 : vector<1x128x128xbf16> to vector<128x128xbf16>
    %cst_19 = arith.constant dense<0.000000e+00> : vector<32x128xf32>
    %45 = tpu.matmul %42, %44, %cst_19 {dimension_numbers = #tpu.dot_dimension_numbers<[1], [0], [0], [1], [0, 0, 1, 1], [], []>} : vector<32x128xbf16>, vector<128x128xbf16>, vector<32x128xf32> -> vector<32x128xf32>
    %46 = arith.addf %41, %45 : vector<32x128xf32>
    %47 = arith.truncf %37 : vector<32x128xf32> to vector<32x128xbf16>
    %c2 = arith.constant 2 : index
    %c0_20 = arith.constant 0 : index
    %c0_21 = arith.constant 0 : index
    %48 = vector.load %arg2[%c2, %c0_20, %c0_21] : memref<3x128x128xbf16, #tpu.memory_space<vmem>>, vector<1x128x128xbf16>
    %49 = vector.shape_cast %48 : vector<1x128x128xbf16> to vector<128x128xbf16>
    %cst_22 = arith.constant dense<0.000000e+00> : vector<32x128xf32>
    %50 = tpu.matmul %47, %49, %cst_22 {dimension_numbers = #tpu.dot_dimension_numbers<[1], [0], [0], [1], [0, 0, 1, 1], [], []>} : vector<32x128xbf16>, vector<128x128xbf16>, vector<32x128xf32> -> vector<32x128xf32>
    %51 = arith.addf %46, %50 : vector<32x128xf32>
    %52 = vector.shape_cast %51 : vector<32x128xf32> to vector<2x16x128xf32>
    %c0_23 = arith.constant 0 : index
    %c0_24 = arith.constant 0 : index
    %c0_25 = arith.constant 0 : index
    %53 = vector.load %arg6[%c0_23, %c0_24, %c0_25] : memref<2x16x128xf32, #tpu.memory_space<vmem>>, vector<2x16x128xf32>
    tpu.vector_store %arg6[%c0_23, %c0_24, %c0_25], %52 {strides = array<i32>} : memref<2x16x128xf32, #tpu.memory_space<vmem>>, vector<2x16x128xf32>,
    %c0_26 = arith.constant 0 : index
    %c0_27 = arith.constant 0 : index
    %54 = vector.load %arg3[%c0_26, %c0_27] : memref<128x128xf32, #tpu.memory_space<vmem>>, vector<128x128xf32>
    %cst_28 = arith.constant dense<0.000000e+00> : vector<32x128xf32>
    %55 = tpu.matmul %51, %54, %cst_28 {dimension_numbers = #tpu.dot_dimension_numbers<[1], [0], [0], [1], [0, 0, 1, 1], [], []>} : vector<32x128xf32>, vector<128x128xf32>, vector<32x128xf32> -> vector<32x128xf32>
    %cst_29 = arith.constant dense<0.000000e+00> : vector<128xf32>
    %56 = vector.multi_reduction <add>, %55, %cst_29 [0] : vector<32x128xf32> to vector<128xf32>
    %57 = vector.shape_cast %56 : vector<128xf32> to vector<1x128xf32>
    %58 = arith.mulf %51, %51 : vector<32x128xf32>
    %cst_30 = arith.constant dense<0.000000e+00> : vector<32x128xf32>
    %59 = tpu.matmul %58, %54, %cst_30 {dimension_numbers = #tpu.dot_dimension_numbers<[1], [0], [0], [1], [0, 0, 1, 1], [], []>} : vector<32x128xf32>, vector<128x128xf32>, vector<32x128xf32> -> vector<32x128xf32>
    %cst_31 = arith.constant dense<0.000000e+00> : vector<128xf32>
    %60 = vector.multi_reduction <add>, %59, %cst_31 [0] : vector<32x128xf32> to vector<128xf32>
    %61 = vector.shape_cast %60 : vector<128xf32> to vector<1x128xf32>
    %62 = tpu.concatenate %57, %61 in 0 : vector<1x128xf32>, vector<1x128xf32> -> vector<2x128xf32>
    %63 = vector.shape_cast %62 : vector<2x128xf32> to vector<1x2x128xf32>
    %c0_32 = arith.constant 0 : index
    %c0_33 = arith.constant 0 : index
    %c0_34 = arith.constant 0 : index
    %64 = vector.load %arg7[%c0_32, %c0_33, %c0_34] : memref<1x2x128xf32, #tpu.memory_space<vmem>>, vector<1x2x128xf32>
    tpu.vector_store %arg7[%c0_32, %c0_33, %c0_34], %63 {strides = array<i32>} : memref<1x2x128xf32, #tpu.memory_space<vmem>>, vector<1x2x128xf32>,
    return
  }
  func.func @transform_0(%arg0: i32) -> (i32, i32, i32) {
    %c0_i32 = arith.constant 0 : i32
    %c0_i32_0 = arith.constant 0 : i32
    %c0_i32_1 = arith.constant 0 : i32
    return %arg0, %c0_i32, %c0_i32_0 : i32, i32, i32
  }
  func.func @transform_1(%arg0: i32) -> (i32, i32, i32) {
    %c0_i32 = arith.constant 0 : i32
    %c0_i32_0 = arith.constant 0 : i32
    %c0_i32_1 = arith.constant 0 : i32
    %c0_i32_2 = arith.constant 0 : i32
    return %c0_i32, %c0_i32_0, %c0_i32_1 : i32, i32, i32
  }
  func.func @transform_2(%arg0: i32) -> (i32, i32) {
    %c0_i32 = arith.constant 0 : i32
    %c0_i32_0 = arith.constant 0 : i32
    %c0_i32_1 = arith.constant 0 : i32
    return %c0_i32, %c0_i32_0 : i32, i32
  }
  func.func @transform_3(%arg0: i32) -> (i32, i32) {
    %c0_i32 = arith.constant 0 : i32
    %c0_i32_0 = arith.constant 0 : i32
    %c0_i32_1 = arith.constant 0 : i32
    return %c0_i32, %c0_i32_0 : i32, i32
  }
  func.func @transform_4(%arg0: i32) -> (i32, i32) {
    %c0_i32 = arith.constant 0 : i32
    %c0_i32_0 = arith.constant 0 : i32
    %c0_i32_1 = arith.constant 0 : i32
    return %c0_i32, %c0_i32_0 : i32, i32
  }
  func.func @transform_5(%arg0: i32) -> (i32, i32, i32) {
    %c0_i32 = arith.constant 0 : i32
    %c0_i32_0 = arith.constant 0 : i32
    %c0_i32_1 = arith.constant 0 : i32
    return %arg0, %c0_i32, %c0_i32_0 : i32, i32, i32
  }
  func.func @transform_6(%arg0: i32) -> (i32, i32, i32) {
    %c0_i32 = arith.constant 0 : i32
    %c0_i32_0 = arith.constant 0 : i32
    %c0_i32_1 = arith.constant 0 : i32
    return %arg0, %c0_i32, %c0_i32_0 : i32, i32, i32
  }
}

</mosaic_0001>

<llo_original>
// kernel: double_conv_forward.2
$region0: #{double_conv_forward.2}
  #allocation0 [shape = 'u32[]', space=smem, size = 0x4, offset = 0x4, fixed_abs, tag = 'smem constant byte address 0x4 - core index']
  #allocation1 [shape = 'u32[144,128]{1,0:T(1,128)}', space=vmem, size = 0x12000, scoped, tag = 'internal scratch']
  %s0 = inlined_call_operand.vmem [shape: f32[2,16,64], index: 0, kind: input, shape index: {}]
  %s1 = inlined_call_operand.vmem [shape: bf16[3,64,128], index: 1, kind: input, shape index: {}]
  %s2 = inlined_call_operand.vmem [shape: f32[128,128], index: 2, kind: input, shape index: {}]
  %s3 = inlined_call_operand.vmem [shape: bf16[2,16,128], index: 3, kind: output, shape index: {0}]
  %s4 = inlined_call_operand.vmem [shape: f32[1,2,128], index: 4, kind: output, shape index: {1}]
  %5 = xla_tuple %s3, %s4
  %s6 = sld [smem:[#allocation0]]
  $region30: #{double_conv_forward.2} parent=0
    _
  %s8 = ssub.s32 1, %s6
  %s9 = scalar_select 0, %s8, %s6
  // Predicated region
  $region2: #{double_conv_forward.2} parent=0 // pred_check
    _
  $region3: #{double_conv_forward.2} parent=0 // pred_check_branch
    %11 = sbr.rel (0) target = $region5
  $region4: #{double_conv_forward.2} parent=0 // pred_region
    _
  $region5: #{double_conv_forward.2} parent=0 // pred_fallthru
    _
  // Predicated region
  $region6: #{double_conv_forward.2} parent=0 // pred_check
    _
  $region7: #{double_conv_forward.2} parent=0 // pred_check_branch
    %13 = sbr.rel (0) target = $region9
  $region8: #{double_conv_forward.2} parent=0 // pred_region
    _
  $region9: #{double_conv_forward.2} parent=0 // pred_fallthru
    _
  // Predicated region
  $region10: #{double_conv_forward.2} parent=0 // pred_check
    _
  $region11: #{double_conv_forward.2} parent=0 // pred_check_branch
    %15 = sbr.rel (0) target = $region13
  $region12: #{double_conv_forward.2} parent=0 // pred_region
    _
  $region13: #{double_conv_forward.2} parent=0 // pred_fallthru
    _
  %v17 = vld [vmem:[%s0] sm:$0xff]
  %v18 = vld [vmem:[%s0 + $0x8] sm:$0xff]
  %v19 = vld [vmem:[%s0 + $0x10] sm:$0xff]
  %v20 = vld [vmem:[%s0 + $0x18] sm:$0xff]
  %v21 = vlaneseq
  %v22 = vshrl.u32 %v21, 7
  %v23 = vadd.s32 %v22, 8
  %v24 = vadd.s32 %v22, 16
  %v25 = vadd.s32 %v22, 24
  %vm26 = vcmp.lt.s32.totalorder %v22, 0
  %v27 = vsub.s32 0, %v22
  %v28 = vsel %vm26, %v27, %v22
  %v29 = vshrl.u32 %v28, 4
  %v30 = vand.u32 %v28, 15
  %v31 = vsub.s32 0, %v30
  %v32 = vsel %vm26, %v31, %v30
  %vm33 = vcmp.lt.s32.totalorder %v23, 0
  %v34 = vsub.s32 0, %v23
  %v35 = vsel %vm33, %v34, %v23
  %v36 = vshrl.u32 %v35, 4
  %v37 = vand.u32 %v35, 15
  %v38 = vsub.s32 0, %v37
  %v39 = vsel %vm33, %v38, %v37
  %vm40 = vcmp.lt.s32.totalorder %v24, 0
  %v41 = vsub.s32 0, %v24
  %v42 = vsel %vm40, %v41, %v24
  %v43 = vshrl.u32 %v42, 4
  %v44 = vand.u32 %v42, 15
  %v45 = vsub.s32 0, %v44
  %v46 = vsel %vm40, %v45, %v44
  %vm47 = vcmp.lt.s32.totalorder %v25, 0
  %v48 = vsub.s32 0, %v25
  %v49 = vsel %vm47, %v48, %v25
  %v50 = vshrl.u32 %v49, 4
  %v51 = vand.u32 %v49, 15
  %v52 = vsub.s32 0, %v51
  %v53 = vsel %vm47, %v52, %v51
  %vm54 = vcmp.ne.s32.totalorder %v32, 0
  %vm55 = vcmp.ne.s32.totalorder %v39, 0
  %vm56 = vcmp.ne.s32.totalorder %v46, 0
  %vm57 = vcmp.ne.s32.totalorder %v53, 0
  %vm58 = vcmp.lt.s32.totalorder %v32, 0
  %vm59 = vcmp.lt.s32.totalorder %v39, 0
  %vm60 = vcmp.lt.s32.totalorder %v46, 0
  %vm61 = vcmp.lt.s32.totalorder %v53, 0
  %vm62 = vmand %vm58, %vm54
  %vm63 = vmand %vm59, %vm55
  %vm64 = vmand %vm60, %vm56
  %vm65 = vmand %vm61, %vm57
  %v66 = vadd.s32 %v32, 16
  %v67 = vadd.s32 %v39, 16
  %v68 = vadd.s32 %v46, 16
  %v69 = vadd.s32 %v53, 16
  %v70 = vsel %vm62, %v66, %v32
  %v71 = vsel %vm63, %v67, %v39
  %v72 = vsel %vm64, %v68, %v46
  %v73 = vsel %vm65, %v69, %v53
  %vm74 = vcmp.ne.s32.totalorder %v70, 0
  %vm75 = vcmp.ne.s32.totalorder %v71, 0
  %vm76 = vcmp.ne.s32.totalorder %v72, 0
  %vm77 = vcmp.ne.s32.totalorder %v73, 0
  %v78 = vrot.slane %v17, 7
  %v79 = vrot.slane %v18, 7
  %v80 = vrot.slane %v19, 7
  %v81 = vrot.slane %v20, 7
  %vm82 = vcmp.lt.s32.totalorder %v22, 1
  %v83 = vsel %vm82, %v80, %v81
  %v84 = vsel %vm82, %v79, %v80
  %v85 = vsel %vm82, %v78, %v79
  %v86 = vsel %vm82, %v81, %v78
  %v87 = vsel %vm74, %v86, 0.0
  %v88 = vsel %vm75, %v85, 0.0
  %v89 = vsel %vm76, %v84, 0.0
  %v90 = vsel %vm77, %v83, 0.0
  %vm91 = vcmp.ne.s32.totalorder %v70, 15
  %vm92 = vcmp.ne.s32.totalorder %v71, 15
  %vm93 = vcmp.ne.s32.totalorder %v72, 15
  %vm94 = vcmp.ne.s32.totalorder %v73, 15
  %v95 = vrot.slane %v17, 1
  %v96 = vrot.slane %v18, 1
  %v97 = vrot.slane %v19, 1
  %v98 = vrot.slane %v20, 1
  %vm99 = vcmp.lt.s32.totalorder %v22, 7
  %v100 = vsel %vm99, %v97, %v98
  %v101 = vsel %vm99, %v96, %v97
  %v102 = vsel %vm99, %v95, %v96
  %v103 = vsel %vm99, %v98, %v95
  %v104 = vsel %vm91, %v102, 0.0
  %v105 = vsel %vm92, %v101, 0.0
  %v106 = vsel %vm93, %v100, 0.0
  %v107 = vsel %vm94, %v103, 0.0
  %v108 = vpack.c.bf16 %v88, %v87
  %v109 = vpack.c.bf16 %v90, %v89
  %v110 = vld [vmem:[%s1] sm:$0xf]
  %v111 = vld [vmem:[%s1 + $0x4] sm:$0xf]
  %v112 = vld [vmem:[%s1 + $0x8] sm:$0xf]
  %v113 = vld [vmem:[%s1 + $0xc] sm:$0xf]
  %v114 = vld [vmem:[%s1 + $0x10] sm:$0xf]
  %v115 = vld [vmem:[%s1 + $0x14] sm:$0xf]
  %v116 = vld [vmem:[%s1 + $0x18] sm:$0xf]
  %v117 = vld [vmem:[%s1 + $0x1c] sm:$0xf]
  %v118 = vpack.c.bf16 %v18, %v17
  %v119 = vpack.c.bf16 %v20, %v19
  %s120 = scalar_lea.vmem %s1, 32
  %v121 = vld [vmem:[%s120] sm:$0xf]
  %v122 = vld [vmem:[%s120 + $0x4] sm:$0xf]
  %v123 = vld [vmem:[%s120 + $0x8] sm:$0xf]
  %v124 = vld [vmem:[%s120 + $0xc] sm:$0xf]
  %v125 = vld [vmem:[%s120 + $0x10] sm:$0xf]
  %v126 = vld [vmem:[%s120 + $0x14] sm:$0xf]
  %v127 = vld [vmem:[%s120 + $0x18] sm:$0xf]
  %v128 = vld [vmem:[%s120 + $0x1c] sm:$0xf]
  %v137 = vunpack.c.l.b16 %v121
  %v138 = vunpack.c.l.b16 %v122
  %v139 = vunpack.c.l.b16 %v123
  %v140 = vunpack.c.l.b16 %v124
  %v141 = vunpack.c.l.b16 %v125
  %v142 = vunpack.c.l.b16 %v126
  %v143 = vunpack.c.l.b16 %v127
  %v144 = vunpack.c.l.b16 %v128
  %v145 = vpack.c.b16 %v138, %v137
  %v146 = vpack.c.b16 %v140, %v139
  %v147 = vpack.c.b16 %v142, %v141
  %v148 = vpack.c.b16 %v144, %v143
  %vm153 = vcmask 523264
  %v155 = vsel %vm153, %v118, 0
  %v158 = vsel %vm153, %v119, 0
  %160 = vmatprep.subr.bf16.mxu0 0
  %161 = vmatpush1.bf16.msra.mxu0 %v145
  %162 = vmatprep.subr.bf16.mxu0 0
  %163 = vmatpush1.bf16.msra.mxu0 %v146
  %164 = vmatprep.subr.bf16.mxu0 0
  %165 = vmatpush1.bf16.msra.mxu0 %v147
  %166 = vmatprep.subr.bf16.mxu0 0
  %167 = vmatpush1.bf16.msra.mxu0 %v148
  %168 = vmatprep.subr.bf16.mxu0 0
  %169 = vmatpush1.bf16.msra.mxu0 0
  %170 = vmatprep.subr.bf16.mxu0 0
  %171 = vmatpush1.bf16.msra.mxu0 0
  %172 = vmatprep.subr.bf16.mxu0 0
  %173 = vmatpush1.bf16.msra.mxu0 0
  %174 = vmatprep.subr.bf16.mxu0 0
  %175 = vmatpush1.bf16.msra.mxu0 0
  %176 = vmatprep.subr.bf16.mxu0 0
  %177 = vmatpush1.bf16.msra.mxu0 0
  %178 = vmatprep.subr.bf16.mxu0 0
  %179 = vmatpush1.bf16.msra.mxu0 0
  %180 = vmatprep.subr.bf16.mxu0 0
  %181 = vmatpush1.bf16.msra.mxu0 0
  %182 = vmatprep.subr.bf16.mxu0 0
  %183 = vmatpush1.bf16.msra.mxu0 0
  %184 = vmatprep.subr.bf16.mxu0 0
  %185 = vmatpush1.bf16.msra.mxu0 0
  %186 = vmatprep.subr.bf16.mxu0 0
  %187 = vmatpush1.bf16.msra.mxu0 0
  %188 = vmatprep.subr.bf16.mxu0 0
  %189 = vmatpush1.bf16.msra.mxu0 0
  %190 = vmatprep.subr.bf16.mxu0 0
  %191 = vmatpush1.bf16.msra.mxu0 0
  %192 = vmatprep.mubr.bf16.mxu0 0
  %193 = vmatmul.mubr.bf16.gmra.mrb[0].mxu0 %v155
  %v194 = vpop.f32.mrb[0].mxu0
  %v195 = vadd.f32 0.0, %v194
  %v196 = vpop.f32.mrb[0].mxu0
  %v197 = vpop.f32.mrb[0].mxu0
  %v198 = vadd.f32 0.0, %v197
  %v199 = vpop.f32.mrb[0].mxu0
  %200 = vmatprep.mubr.bf16.mxu0 0
  %201 = vmatmul.mubr.bf16.gmra.mrb[0].mxu0 %v158
  %v202 = vpop.f32.mrb[0].mxu0
  %v203 = vadd.f32 0.0, %v202
  %v204 = vpop.f32.mrb[0].mxu0
  %v205 = vpop.f32.mrb[0].mxu0
  %v206 = vadd.f32 0.0, %v205
  %v207 = vpop.f32.mrb[0].mxu0
  %208 = vdwg.mxu0
  %v217 = vunpack.c.l.b16 %v110
  %v218 = vunpack.c.l.b16 %v111
  %v219 = vunpack.c.l.b16 %v112
  %v220 = vunpack.c.l.b16 %v113
  %v221 = vunpack.c.l.b16 %v114
  %v222 = vunpack.c.l.b16 %v115
  %v223 = vunpack.c.l.b16 %v116
  %v224 = vunpack.c.l.b16 %v117
  %v225 = vpack.c.b16 %v218, %v217
  %v226 = vpack.c.b16 %v220, %v219
  %v227 = vpack.c.b16 %v222, %v221
  %v228 = vpack.c.b16 %v224, %v223
  %v234 = vsel %vm153, %v108, 0
  %v237 = vsel %vm153, %v109, 0
  %239 = vmatprep.subr.bf16.mxu0 0
  %240 = vmatpush1.bf16.msra.mxu0 %v225
  %241 = vmatprep.subr.bf16.mxu0 0
  %242 = vmatpush1.bf16.msra.mxu0 %v226
  %243 = vmatprep.subr.bf16.mxu0 0
  %244 = vmatpush1.bf16.msra.mxu0 %v227
  %245 = vmatprep.subr.bf16.mxu0 0
  %246 = vmatpush1.bf16.msra.mxu0 %v228
  %247 = vmatprep.subr.bf16.mxu0 0
  %248 = vmatpush1.bf16.msra.mxu0 0
  %249 = vmatprep.subr.bf16.mxu0 0
  %250 = vmatpush1.bf16.msra.mxu0 0
  %251 = vmatprep.subr.bf16.mxu0 0
  %252 = vmatpush1.bf16.msra.mxu0 0
  %253 = vmatprep.subr.bf16.mxu0 0
  %254 = vmatpush1.bf16.msra.mxu0 0
  %255 = vmatprep.subr.bf16.mxu0 0
  %256 = vmatpush1.bf16.msra.mxu0 0
  %257 = vmatprep.subr.bf16.mxu0 0
  %258 = vmatpush1.bf16.msra.mxu0 0
  %259 = vmatprep.subr.bf16.mxu0 0
  %260 = vmatpush1.bf16.msra.mxu0 0
  %261 = vmatprep.subr.bf16.mxu0 0
  %262 = vmatpush1.bf16.msra.mxu0 0
  %263 = vmatprep.subr.bf16.mxu0 0
  %264 = vmatpush1.bf16.msra.mxu0 0
  %265 = vmatprep.subr.bf16.mxu0 0
  %266 = vmatpush1.bf16.msra.mxu0 0
  %267 = vmatprep.subr.bf16.mxu0 0
  %268 = vmatpush1.bf16.msra.mxu0 0
  %269 = vmatprep.subr.bf16.mxu0 0
  %270 = vmatpush1.bf16.msra.mxu0 0
  %271 = vmatprep.mubr.bf16.mxu0 0
  %272 = vmatmul.mubr.bf16.gmra.mrb[0].mxu0 %v234
  %v273 = vpop.f32.mrb[0].mxu0
  %v274 = vadd.f32 %v195, %v273
  %v275 = vpop.f32.mrb[0].mxu0
  %v276 = vpop.f32.mrb[0].mxu0
  %v277 = vadd.f32 %v198, %v276
  %v278 = vpop.f32.mrb[0].mxu0
  %279 = vmatprep.mubr.bf16.mxu0 0
  %280 = vmatmul.mubr.bf16.gmra.mrb[0].mxu0 %v237
  %v281 = vpop.f32.mrb[0].mxu0
  %v282 = vadd.f32 %v203, %v281
  %v283 = vpop.f32.mrb[0].mxu0
  %v284 = vpop.f32.mrb[0].mxu0
  %v285 = vadd.f32 %v206, %v284
  %v286 = vpop.f32.mrb[0].mxu0
  %287 = vdwg.mxu0
  %v288 = vpack.c.bf16 %v105, %v104
  %v289 = vpack.c.bf16 %v107, %v106
  %s290 = scalar_lea.vmem %s1, 64
  %v291 = vld [vmem:[%s290] sm:$0xf]
  %v292 = vld [vmem:[%s290 + $0x4] sm:$0xf]
  %v293 = vld [vmem:[%s290 + $0x8] sm:$0xf]
  %v294 = vld [vmem:[%s290 + $0xc] sm:$0xf]
  %v295 = vld [vmem:[%s290 + $0x10] sm:$0xf]
  %v296 = vld [vmem:[%s290 + $0x14] sm:$0xf]
  %v297 = vld [vmem:[%s290 + $0x18] sm:$0xf]
  %v298 = vld [vmem:[%s290 + $0x1c] sm:$0xf]
  %v307 = vunpack.c.l.b16 %v291
  %v308 = vunpack.c.l.b16 %v292
  %v309 = vunpack.c.l.b16 %v293
  %v310 = vunpack.c.l.b16 %v294
  %v311 = vunpack.c.l.b16 %v295
  %v312 = vunpack.c.l.b16 %v296
  %v313 = vunpack.c.l.b16 %v297
  %v314 = vunpack.c.l.b16 %v298
  %v315 = vpack.c.b16 %v308, %v307
  %v316 = vpack.c.b16 %v310, %v309
  %v317 = vpack.c.b16 %v312, %v311
  %v318 = vpack.c.b16 %v314, %v313
  %v324 = vsel %vm153, %v288, 0
  %v327 = vsel %vm153, %v289, 0
  %329 = vmatprep.subr.bf16.mxu0 0
  %330 = vmatpush1.bf16.msra.mxu0 %v315
  %331 = vmatprep.subr.bf16.mxu0 0
  %332 = vmatpush1.bf16.msra.mxu0 %v316
  %333 = vmatprep.subr.bf16.mxu0 0
  %334 = vmatpush1.bf16.msra.mxu0 %v317
  %335 = vmatprep.subr.bf16.mxu0 0
  %336 = vmatpush1.bf16.msra.mxu0 %v318
  %337 = vmatprep.subr.bf16.mxu0 0
  %338 = vmatpush1.bf16.msra.mxu0 0
  %339 = vmatprep.subr.bf16.mxu0 0
  %340 = vmatpush1.bf16.msra.mxu0 0
  %341 = vmatprep.subr.bf16.mxu0 0
  %342 = vmatpush1.bf16.msra.mxu0 0
  %343 = vmatprep.subr.bf16.mxu0 0
  %344 = vmatpush1.bf16.msra.mxu0 0
  %345 = vmatprep.subr.bf16.mxu0 0
  %346 = vmatpush1.bf16.msra.mxu0 0
  %347 = vmatprep.subr.bf16.mxu0 0
  %348 = vmatpush1.bf16.msra.mxu0 0
  %349 = vmatprep.subr.bf16.mxu0 0
  %350 = vmatpush1.bf16.msra.mxu0 0
  %351 = vmatprep.subr.bf16.mxu0 0
  %352 = vmatpush1.bf16.msra.mxu0 0
  %353 = vmatprep.subr.bf16.mxu0 0
  %354 = vmatpush1.bf16.msra.mxu0 0
  %355 = vmatprep.subr.bf16.mxu0 0
  %356 = vmatpush1.bf16.msra.mxu0 0
  %357 = vmatprep.subr.bf16.mxu0 0
  %358 = vmatpush1.bf16.msra.mxu0 0
  %359 = vmatprep.subr.bf16.mxu0 0
  %360 = vmatpush1.bf16.msra.mxu0 0
  %361 = vmatprep.mubr.bf16.mxu0 0
  %362 = vmatmul.mubr.bf16.gmra.mrb[0].mxu0 %v324
  %v363 = vpop.f32.mrb[0].mxu0
  %v364 = vadd.f32 0.0, %v363
  %v365 = vpop.f32.mrb[0].mxu0
  %v366 = vpop.f32.mrb[0].mxu0
  %v367 = vadd.f32 0.0, %v366
  %v368 = vpop.f32.mrb[0].mxu0
  %369 = vmatprep.mubr.bf16.mxu0 0
  %370 = vmatmul.mubr.bf16.gmra.mrb[0].mxu0 %v327
  %v371 = vpop.f32.mrb[0].mxu0
  %v372 = vadd.f32 0.0, %v371
  %v373 = vpop.f32.mrb[0].mxu0
  %v374 = vpop.f32.mrb[0].mxu0
  %v375 = vadd.f32 0.0, %v374
  %v376 = vpop.f32.mrb[0].mxu0
  %377 = vdwg.mxu0
  %v378 = vadd.f32 %v274, %v364
  %v379 = vadd.f32 %v277, %v367
  %v380 = vadd.f32 %v282, %v372
  %v381 = vadd.f32 %v285, %v375
  %v382 = vpack.c.bf16 %v379, %v378
  %v383 = vpack.c.bf16 %v381, %v380
  %v386 = vunpack.c.l.b16 %v382
  %v387 = vunpack.c.h.b16 %v382
  %v388 = vunpack.c.l.b16 %v383
  %v389 = vunpack.c.h.b16 %v383
  %v390 = vpack.c.b16 %v386, %v386
  %v391 = vpack.c.b16 %v387, %v387
  %v392 = vpack.c.b16 %v388, %v388
  %v393 = vpack.c.b16 %v389, %v389
  %398 = vst [vmem:[%s3] sm:$0xf] %v390
  %399 = vst [vmem:[%s3 + $0x4] sm:$0xf] %v391
  %400 = vst [vmem:[%s3 + $0x8] sm:$0xf] %v392
  %401 = vst [vmem:[%s3 + $0xc] sm:$0xf] %v393
  %v402 = vld [vmem:[%s2] sm:$0xff]
  %v403 = vld [vmem:[%s2 + $0x8] sm:$0xff]
  %v404 = vld [vmem:[%s2 + $0x10] sm:$0xff]
  %v405 = vld [vmem:[%s2 + $0x18] sm:$0xff]
  %v406 = vld [vmem:[%s2 + $0x20] sm:$0xff]
  %v407 = vld [vmem:[%s2 + $0x28] sm:$0xff]
  %v408 = vld [vmem:[%s2 + $0x30] sm:$0xff]
  %v409 = vld [vmem:[%s2 + $0x38] sm:$0xff]
  %v410 = vld [vmem:[%s2 + $0x40] sm:$0xff]
  %v411 = vld [vmem:[%s2 + $0x48] sm:$0xff]
  %v412 = vld [vmem:[%s2 + $0x50] sm:$0xff]
  %v413 = vld [vmem:[%s2 + $0x58] sm:$0xff]
  %v414 = vld [vmem:[%s2 + $0x60] sm:$0xff]
  %v415 = vld [vmem:[%s2 + $0x68] sm:$0xff]
  %v416 = vld [vmem:[%s2 + $0x70] sm:$0xff]
  %v417 = vld [vmem:[%s2 + $0x78] sm:$0xff]
  %418 = vmatprep.subr.mxu0 0.0
  %419 = vmatpush1.msra.mxu0 %v402
  %420 = vmatprep.subr.mxu0 0.0
  %421 = vmatpush1.msra.mxu0 %v403
  %422 = vmatprep.subr.mxu0 0.0
  %423 = vmatpush1.msra.mxu0 %v404
  %424 = vmatprep.subr.mxu0 0.0
  %425 = vmatpush1.msra.mxu0 %v405
  %426 = vmatprep.subr.mxu0 0.0
  %427 = vmatpush1.msra.mxu0 %v406
  %428 = vmatprep.subr.mxu0 0.0
  %429 = vmatpush1.msra.mxu0 %v407
  %430 = vmatprep.subr.mxu0 0.0
  %431 = vmatpush1.msra.mxu0 %v408
  %432 = vmatprep.subr.mxu0 0.0
  %433 = vmatpush1.msra.mxu0 %v409
  %434 = vmatprep.subr.mxu0 0.0
  %435 = vmatpush1.msra.mxu0 %v410
  %436 = vmatprep.subr.mxu0 0.0
  %437 = vmatpush1.msra.mxu0 %v411
  %438 = vmatprep.subr.mxu0 0.0
  %439 = vmatpush1.msra.mxu0 %v412
  %440 = vmatprep.subr.mxu0 0.0
  %441 = vmatpush1.msra.mxu0 %v413
  %442 = vmatprep.subr.mxu0 0.0
  %443 = vmatpush1.msra.mxu0 %v414
  %444 = vmatprep.subr.mxu0 0.0
  %445 = vmatpush1.msra.mxu0 %v415
  %446 = vmatprep.subr.mxu0 0.0
  %447 = vmatpush1.msra.mxu0 %v416
  %448 = vmatprep.subr.mxu0 0.0
  %449 = vmatpush1.msra.mxu0 %v417
  %450 = vmatprep.subr.mxu0 0.0
  %451 = vmatpush1.msra.mxu0 0.0
  %452 = vmatprep.subr.mxu0 0.0
  %453 = vmatpush1.msra.mxu0 0.0
  %454 = vmatprep.subr.mxu0 0.0
  %455 = vmatpush1.msra.mxu0 0.0
  %456 = vmatprep.subr.mxu0 0.0
  %457 = vmatpush1.msra.mxu0 0.0
  %458 = vmatprep.subr.mxu0 0.0
  %459 = vmatpush1.msra.mxu0 0.0
  %460 = vmatprep.subr.mxu0 0.0
  %461 = vmatpush1.msra.mxu0 0.0
  %462 = vmatprep.subr.mxu0 0.0
  %463 = vmatpush1.msra.mxu0 0.0
  %464 = vmatprep.subr.mxu0 0.0
  %465 = vmatpush1.msra.mxu0 0.0
  %466 = vmatprep.subr.mxu0 0.0
  %467 = vmatpush1.msra.mxu0 0.0
  %468 = vmatprep.subr.mxu0 0.0
  %469 = vmatpush1.msra.mxu0 0.0
  %470 = vmatprep.subr.mxu0 0.0
  %471 = vmatpush1.msra.mxu0 0.0
  %472 = vmatprep.subr.mxu0 0.0
  %473 = vmatpush1.msra.mxu0 0.0
  %474 = vmatprep.subr.mxu0 0.0
  %475 = vmatpush1.msra.mxu0 0.0
  %476 = vmatprep.subr.mxu0 0.0
  %477 = vmatpush1.msra.mxu0 0.0
  %478 = vmatprep.subr.mxu0 0.0
  %479 = vmatpush1.msra.mxu0 0.0
  %480 = vmatprep.subr.mxu0 0.0
  %481 = vmatpush1.msra.mxu0 0.0
  %482 = vmatprep.mubr.f32.mxu0 0.0
  %483 = vmatmul.mubr.f32.gmra.mrb[0].mxu0 %v378
  %v484 = vpop.f32.mrb[0].mxu0
  %v485 = vadd.f32 0.0, %v484
  %v486 = vpop.f32.mrb[0].mxu0
  %487 = vmatprep.mubr.f32.mxu0 0.0
  %488 = vmatmul.mubr.f32.gmra.mrb[0].mxu0 %v379
  %v489 = vpop.f32.mrb[0].mxu0
  %v490 = vadd.f32 0.0, %v489
  %v491 = vpop.f32.mrb[0].mxu0
  %492 = vmatprep.mubr.f32.mxu0 0.0
  %493 = vmatmul.mubr.f32.gmra.mrb[0].mxu0 %v380
  %v494 = vpop.f32.mrb[0].mxu0
  %v495 = vadd.f32 0.0, %v494
  %v496 = vpop.f32.mrb[0].mxu0
  %497 = vmatprep.mubr.f32.mxu0 0.0
  %498 = vmatmul.mubr.f32.gmra.mrb[0].mxu0 %v381
  %v499 = vpop.f32.mrb[0].mxu0
  %v500 = vadd.f32 0.0, %v499
  %v501 = vpop.f32.mrb[0].mxu0
  %502 = vdwg.mxu0
  %v503 = vadd.f32 %v485, %v490
  %v504 = vadd.f32 %v503, %v495
  %v505 = vadd.f32 %v504, %v500
  %v506 = vrot.slane %v505, 4
  %v507 = vadd.f32 %v505, %v506
  %v508 = vrot.slane %v507, 2
  %v509 = vadd.f32 %v507, %v508
  %v510 = vrot.slane %v509, 1
  %v511 = vadd.f32 %v509, %v510
  %v512 = vmul.f32 %v378, %v378
  %v513 = vmul.f32 %v379, %v379
  %v514 = vmul.f32 %v380, %v380
  %v515 = vmul.f32 %v381, %v381
  %516 = vmatprep.subr.mxu0 0.0
  %517 = vmatpush1.msra.mxu0 %v402
  %518 = vmatprep.subr.mxu0 0.0
  %519 = vmatpush1.msra.mxu0 %v403
  %520 = vmatprep.subr.mxu0 0.0
  %521 = vmatpush1.msra.mxu0 %v404
  %522 = vmatprep.subr.mxu0 0.0
  %523 = vmatpush1.msra.mxu0 %v405
  %524 = vmatprep.subr.mxu0 0.0
  %525 = vmatpush1.msra.mxu0 %v406
  %526 = vmatprep.subr.mxu0 0.0
  %527 = vmatpush1.msra.mxu0 %v407
  %528 = vmatprep.subr.mxu0 0.0
  %529 = vmatpush1.msra.mxu0 %v408
  %530 = vmatprep.subr.mxu0 0.0
  %531 = vmatpush1.msra.mxu0 %v409
  %532 = vmatprep.subr.mxu0 0.0
  %533 = vmatpush1.msra.mxu0 %v410
  %534 = vmatprep.subr.mxu0 0.0
  %535 = vmatpush1.msra.mxu0 %v411
  %536 = vmatprep.subr.mxu0 0.0
  %537 = vmatpush1.msra.mxu0 %v412
  %538 = vmatprep.subr.mxu0 0.0
  %539 = vmatpush1.msra.mxu0 %v413
  %540 = vmatprep.subr.mxu0 0.0
  %541 = vmatpush1.msra.mxu0 %v414
  %542 = vmatprep.subr.mxu0 0.0
  %543 = vmatpush1.msra.mxu0 %v415
  %544 = vmatprep.subr.mxu0 0.0
  %545 = vmatpush1.msra.mxu0 %v416
  %546 = vmatprep.subr.mxu0 0.0
  %547 = vmatpush1.msra.mxu0 %v417
  %548 = vmatprep.subr.mxu0 0.0
  %549 = vmatpush1.msra.mxu0 0.0
  %550 = vmatprep.subr.mxu0 0.0
  %551 = vmatpush1.msra.mxu0 0.0
  %552 = vmatprep.subr.mxu0 0.0
  %553 = vmatpush1.msra.mxu0 0.0
  %554 = vmatprep.subr.mxu0 0.0
  %555 = vmatpush1.msra.mxu0 0.0
  %556 = vmatprep.subr.mxu0 0.0
  %557 = vmatpush1.msra.mxu0 0.0
  %558 = vmatprep.subr.mxu0 0.0
  %559 = vmatpush1.msra.mxu0 0.0
  %560 = vmatprep.subr.mxu0 0.0
  %561 = vmatpush1.msra.mxu0 0.0
  %562 = vmatprep.subr.mxu0 0.0
  %563 = vmatpush1.msra.mxu0 0.0
  %564 = vmatprep.subr.mxu0 0.0
  %565 = vmatpush1.msra.mxu0 0.0
  %566 = vmatprep.subr.mxu0 0.0
  %567 = vmatpush1.msra.mxu0 0.0
  %568 = vmatprep.subr.mxu0 0.0
  %569 = vmatpush1.msra.mxu0 0.0
  %570 = vmatprep.subr.mxu0 0.0
  %571 = vmatpush1.msra.mxu0 0.0
  %572 = vmatprep.subr.mxu0 0.0
  %573 = vmatpush1.msra.mxu0 0.0
  %574 = vmatprep.subr.mxu0 0.0
  %575 = vmatpush1.msra.mxu0 0.0
  %576 = vmatprep.subr.mxu0 0.0
  %577 = vmatpush1.msra.mxu0 0.0
  %578 = vmatprep.subr.mxu0 0.0
  %579 = vmatpush1.msra.mxu0 0.0
  %580 = vmatprep.mubr.f32.mxu0 0.0
  %581 = vmatmul.mubr.f32.gmra.mrb[0].mxu0 %v512
  %v582 = vpop.f32.mrb[0].mxu0
  %v583 = vadd.f32 0.0, %v582
  %v584 = vpop.f32.mrb[0].mxu0
  %585 = vmatprep.mubr.f32.mxu0 0.0
  %586 = vmatmul.mubr.f32.gmra.mrb[0].mxu0 %v513
  %v587 = vpop.f32.mrb[0].mxu0
  %v588 = vadd.f32 0.0, %v587
  %v589 = vpop.f32.mrb[0].mxu0
  %590 = vmatprep.mubr.f32.mxu0 0.0
  %591 = vmatmul.mubr.f32.gmra.mrb[0].mxu0 %v514
  %v592 = vpop.f32.mrb[0].mxu0
  %v593 = vadd.f32 0.0, %v592
  %v594 = vpop.f32.mrb[0].mxu0
  %595 = vmatprep.mubr.f32.mxu0 0.0
  %596 = vmatmul.mubr.f32.gmra.mrb[0].mxu0 %v515
  %v597 = vpop.f32.mrb[0].mxu0
  %v598 = vadd.f32 0.0, %v597
  %v599 = vpop.f32.mrb[0].mxu0
  %600 = vdwg.mxu0
  %v601 = vadd.f32 %v583, %v588
  %v602 = vadd.f32 %v601, %v593
  %v603 = vadd.f32 %v602, %v598
  %v604 = vrot.slane %v603, 4
  %v605 = vadd.f32 %v603, %v604
  %v606 = vrot.slane %v605, 2
  %v607 = vadd.f32 %v605, %v606
  %v608 = vrot.slane %v607, 1
  %v609 = vadd.f32 %v607, %v608
  %vm610 = vcmask 1040384
  %v611 = vsel %vm610, %v511, %v609
  %612 = vst [vmem:[%s4] sm:$0x3] %v611
  // Predicated region
  $region14: #{double_conv_forward.2} parent=0 // pred_check
    _
  $region15: #{double_conv_forward.2} parent=0 // pred_check_branch
    %614 = sbr.rel (0) target = $region17
  $region16: #{double_conv_forward.2} parent=0 // pred_region
    _
  $region17: #{double_conv_forward.2} parent=0 // pred_fallthru
    _
  // Predicated region
  $region18: #{double_conv_forward.2} parent=0 // pred_check
    _
  $region19: #{double_conv_forward.2} parent=0 // pred_check_branch
    %616 = sbr.rel (0) target = $region21
  $region20: #{double_conv_forward.2} parent=0 // pred_region
    _
  $region21: #{double_conv_forward.2} parent=0 // pred_fallthru
    _
  // Predicated region
  $region22: #{double_conv_forward.2} parent=0 // pred_check
    _
  $region23: #{double_conv_forward.2} parent=0 // pred_check_branch
    %618 = sbr.rel (0) target = $region25
  $region24: #{double_conv_forward.2} parent=0 // pred_region
    _
  $region25: #{double_conv_forward.2} parent=0 // pred_fallthru
    _
  // Predicated region
  $region26: #{double_conv_forward.2} parent=0 // pred_check
    _
  $region27: #{double_conv_forward.2} parent=0 // pred_check_branch
    %620 = sbr.rel (0) target = $region29
  $region28: #{double_conv_forward.2} parent=0 // pred_region
    _
  $region29: #{double_conv_forward.2} parent=0 // pred_fallthru
    _

// kernel: tile.18
$region0: #{tile.18}
  #allocation0 [shape = 's32[1]{0}', space=sflag, size = 0x4, scoped, tag = 'scoped memory for tile.18']
  %s0 = inlined_call_operand.vmem [shape: f32[8], index: 0, kind: input, shape index: {}]
  %s1 = inlined_call_operand.vmem [shape: f32[16,8], index: 1, kind: output, shape index: {}]
  // Predicated region
  $region2: #{tile.18} parent=0 // pred_check
    _
  $region3: #{tile.18} parent=0 // pred_check_branch
    %3 = sbr.rel (0) target = $region5
  $region4: #{tile.18} parent=0 // pred_region
    _
  $region5: #{tile.18} parent=0 // pred_fallthru
    _
  %v4 = vld [vmem:[%s0] ss:$0 sm:$0xff]
  %5 = vst [vmem:[%s1] sm:$0xff] %v4
  %s6 = scalar_lea.vmem %s1, 8
  %7 = vst [vmem:[%s6] sm:$0xff] %v4

// kernel: tile.19
$region0: #{tile.19}
  %s0 = inlined_call_operand.vmem [shape: f32[16,8], index: 0, kind: input, shape index: {}]
  %s1 = inlined_call_operand.vmem [shape: f32[1,128], index: 1, kind: output, shape index: {}]
  $region1: #{tile.19} parent=0
    #allocation0 [shape = 'u8[4096]{0}', space=vmem, size = 0x1000, scoped, tag = 'scoped mem for output reshape']
    %v2 = vld [vmem:[%s0] sm:$0x1]
    %vm3 = vcmask 64512
    %4 = vst.msk [vmem:[#allocation0] sm:$0x1] %vm3, %v2
    %s5 = scalar_lea.vmem %s0, 15
    %v6 = vld [vmem:[%s5] sm:$0x1]
    %7 = vrot.lane.b32.xlu0 %v6, 120
    %v8 = vpop.permute.xlu0 %7
    %vm9 = vcmask 1048512
    %10 = vst.msk [vmem:[#allocation0] sm:$0x1] %vm9, %v8
    %s11 = scalar_lea.vmem %s0, 14
    %v12 = vld [vmem:[%s11] sm:$0x1]
    %13 = vrot.lane.b32.xlu0 %v12, 112
    %v14 = vpop.permute.xlu0 %13
    %vm15 = vcmask 982912
    %16 = vst.msk [vmem:[#allocation0] sm:$0x1] %vm15, %v14
    %s17 = scalar_lea.vmem %s0, 13
    %v18 = vld [vmem:[%s17] sm:$0x1]
    %19 = vrot.lane.b32.xlu0 %v18, 104
    %v20 = vpop.permute.xlu0 %19
    %vm21 = vcmask 917312
    %22 = vst.msk [vmem:[#allocation0] sm:$0x1] %vm21, %v20
    %s23 = scalar_lea.vmem %s0, 12
    %v24 = vld [vmem:[%s23] sm:$0x1]
    %25 = vrot.lane.b32.xlu0 %v24, 96
    %v26 = vpop.permute.xlu0 %25
    %vm27 = vcmask 851712
    %28 = vst.msk [vmem:[#allocation0] sm:$0x1] %vm27, %v26
    %s29 = scalar_lea.vmem %s0, 11
    %v30 = vld [vmem:[%s29] sm:$0x1]
    %31 = vrot.lane.b32.xlu0 %v30, 88
    %v32 = vpop.permute.xlu0 %31
    %vm33 = vcmask 786112
    %34 = vst.msk [vmem:[#allocation0] sm:$0x1] %vm33, %v32
    %s35 = scalar_lea.vmem %s0, 10
    %v36 = vld [vmem:[%s35] sm:$0x1]
    %37 = vrot.lane.b32.xlu0 %v36, 80
    %v38 = vpop.permute.xlu0 %37
    %vm39 = vcmask 720512
    %40 = vst.msk [vmem:[#allocation0] sm:$0x1] %vm39, %v38
    %s41 = scalar_lea.vmem %s0, 9
    %v42 = vld [vmem:[%s41] sm:$0x1]
    %43 = vrot.lane.b32.xlu0 %v42, 72
    %v44 = vpop.permute.xlu0 %43
    %vm45 = vcmask 654912
    %46 = vst.msk [vmem:[#allocation0] sm:$0x1] %vm45, %v44
    %s47 = scalar_lea.vmem %s0, 8
    %v48 = vld [vmem:[%s47] sm:$0x1]
    %49 = vrot.lane.b32.xlu0 %v48, 64
    %v50 = vpop.permute.xlu0 %49
    %vm51 = vcmask 589312
    %52 = vst.msk [vmem:[#allocation0] sm:$0x1] %vm51, %v50
    %s53 = scalar_lea.vmem %s0, 7
    %v54 = vld [vmem:[%s53] sm:$0x1]
    %55 = vrot.lane.b32.xlu0 %v54, 56
    %v56 = vpop.permute.xlu0 %55
    %vm57 = vcmask 523712
    %58 = vst.msk [vmem:[#allocation0] sm:$0x1] %vm57, %v56
    %s59 = scalar_lea.vmem %s0, 6
    %v60 = vld [vmem:[%s59] sm:$0x1]
    %61 = vrot.lane.b32.xlu0 %v60, 48
    %v62 = vpop.permute.xlu0 %61
    %vm63 = vcmask 458112
    %64 = vst.msk [vmem:[#allocation0] sm:$0x1] %vm63, %v62
    %s65 = scalar_lea.vmem %s0, 5
    %v66 = vld [vmem:[%s65] sm:$0x1]
    %67 = vrot.lane.b32.xlu0 %v66, 40
    %v68 = vpop.permute.xlu0 %67
    %vm69 = vcmask 392512
    %70 = vst.msk [vmem:[#allocation0] sm:$0x1] %vm69, %v68
    %s71 = scalar_lea.vmem %s0, 4
    %v72 = vld [vmem:[%s71] sm:$0x1]
    %73 = vrot.lane.b32.xlu0 %v72, 32
    %v74 = vpop.permute.xlu0 %73
    %vm75 = vcmask 326912
    %76 = vst.msk [vmem:[#allocation0] sm:$0x1] %vm75, %v74
    %s77 = scalar_lea.vmem %s0, 3
    %v78 = vld [vmem:[%s77] sm:$0x1]
    %79 = vrot.lane.b32.xlu0 %v78, 24
    %v80 = vpop.permute.xlu0 %79
    %vm81 = vcmask 261312
    %82 = vst.msk [vmem:[#allocation0] sm:$0x1] %vm81, %v80
    %s83 = scalar_lea.vmem %s0, 2
    %v84 = vld [vmem:[%s83] sm:$0x1]
    %85 = vrot.lane.b32.xlu0 %v84, 16
    %v86 = vpop.permute.xlu0 %85
    %vm87 = vcmask 195712
    %88 = vst.msk [vmem:[#allocation0] sm:$0x1] %vm87, %v86
    %s89 = scalar_lea.vmem %s0, 1
    %v90 = vld [vmem:[%s89] sm:$0x1]
    %91 = vrot.lane.b32.xlu0 %v90, 8
    %v92 = vpop.permute.xlu0 %91
    %vm93 = vcmask 130112
    %94 = vst.msk [vmem:[#allocation0] sm:$0x1] %vm93, %v92
    %s96 = sshllo.u32 0, 1
    %v98 = vld [vmem:[#allocation0] sm:%s96]
    %s99 = sshllo.u32 0, 1
    %100 = vst [vmem:[%s1] sm:%s99] %v98

// kernel: double_conv_forward.3
$region0: #{double_conv_forward.3}
  #allocation0 [shape = 'u32[]', space=smem, size = 0x4, offset = 0x4, fixed_abs, tag = 'smem constant byte address 0x4 - core index']
  #allocation1 [shape = 'u32[144,128]{1,0:T(1,128)}', space=vmem, size = 0x12000, scoped, tag = 'internal scratch']
  %s0 = inlined_call_operand.vmem [shape: bf16[2,16,128], index: 0, kind: input, shape index: {}]
  %s1 = inlined_call_operand.vmem [shape: bf16[3,128,128], index: 1, kind: input, shape index: {}]
  %s2 = inlined_call_operand.vmem [shape: f32[128,128], index: 2, kind: input, shape index: {}]
  %s3 = inlined_call_operand.vmem [shape: f32[1,128], index: 3, kind: input, shape index: {}]
  %s4 = inlined_call_operand.vmem [shape: f32[1,128], index: 4, kind: input, shape index: {}]
  %s5 = inlined_call_operand.vmem [shape: f32[2,16,128], index: 5, kind: output, shape index: {0}]
  %s6 = inlined_call_operand.vmem [shape: f32[1,2,128], index: 6, kind: output, shape index: {1}]
  %7 = xla_tuple %s5, %s6
  %s8 = sld [smem:[#allocation0]]
  $region38: #{double_conv_forward.3} parent=0
    _
  %s10 = ssub.s32 1, %s8
  %s11 = scalar_select 0, %s10, %s8
  // Predicated region
  $region2: #{double_conv_forward.3} parent=0 // pred_check
    _
  $region3: #{double_conv_forward.3} parent=0 // pred_check_branch
    %13 = sbr.rel (0) target = $region5
  $region4: #{double_conv_forward.3} parent=0 // pred_region
    _
  $region5: #{double_conv_forward.3} parent=0 // pred_fallthru
    _
  // Predicated region
  $region6: #{double_conv_forward.3} parent=0 // pred_check
    _
  $region7: #{double_conv_forward.3} parent=0 // pred_check_branch
    %15 = sbr.rel (0) target = $region9
  $region8: #{double_conv_forward.3} parent=0 // pred_region
    _
  $region9: #{double_conv_forward.3} parent=0 // pred_fallthru
    _
  // Predicated region
  $region10: #{double_conv_forward.3} parent=0 // pred_check
    _
  $region11: #{double_conv_forward.3} parent=0 // pred_check_branch
    %17 = sbr.rel (0) target = $region13
  $region12: #{double_conv_forward.3} parent=0 // pred_region
    _
  $region13: #{double_conv_forward.3} parent=0 // pred_fallthru
    _
  // Predicated region
  $region14: #{double_conv_forward.3} parent=0 // pred_check
    _
  $region15: #{double_conv_forward.3} parent=0 // pred_check_branch
    %19 = sbr.rel (0) target = $region17
  $region16: #{double_conv_forward.3} parent=0 // pred_region
    _
  $region17: #{double_conv_forward.3} parent=0 // pred_fallthru
    _
  // Predicated region
  $region18: #{double_conv_forward.3} parent=0 // pred_check
    _
  $region19: #{double_conv_forward.3} parent=0 // pred_check_branch
    %21 = sbr.rel (0) target = $region21
  $region20: #{double_conv_forward.3} parent=0 // pred_region
    _
  $region21: #{double_conv_forward.3} parent=0 // pred_fallthru
    _
  %v23 = vld [vmem:[%s0] sm:$0xf]
  %v24 = vld [vmem:[%s0 + $0x4] sm:$0xf]
  %v25 = vld [vmem:[%s0 + $0x8] sm:$0xf]
  %v26 = vld [vmem:[%s0 + $0xc] sm:$0xf]
  %v27 = vunpack.c.l.bf16 %v23
  %v28 = vunpack.c.l.bf16 %v24
  %v29 = vunpack.c.l.bf16 %v25
  %v30 = vunpack.c.l.bf16 %v26
  %v31 = vld [vmem:[%s3] sm:$0x1]
  %v33 = vlaneseq
  %v34 = vshrl.u32 %v33, 7
  %v35 = vsub.s32 0, %v34
  %v36 = vrot.slane %v31, %v35
  %v38 = vmul.f32 %v27, %v36
  %v39 = vmul.f32 %v28, %v36
  %v40 = vmul.f32 %v29, %v36
  %v41 = vmul.f32 %v30, %v36
  %v42 = vld [vmem:[%s4] sm:$0x1]
  %v44 = vlaneseq
  %v45 = vshrl.u32 %v44, 7
  %v46 = vsub.s32 0, %v45
  %v47 = vrot.slane %v42, %v46
  %v49 = vadd.f32 %v38, %v47
  %v50 = vadd.f32 %v39, %v47
  %v51 = vadd.f32 %v40, %v47
  %v52 = vadd.f32 %v41, %v47
  %v53 = vmax.f32 %v49, 0.0
  %v54 = vmax.f32 %v50, 0.0
  %v55 = vmax.f32 %v51, 0.0
  %v56 = vmax.f32 %v52, 0.0
  %v57 = vlaneseq
  %v58 = vshrl.u32 %v57, 7
  %v59 = vadd.s32 %v58, 8
  %v60 = vadd.s32 %v58, 16
  %v61 = vadd.s32 %v58, 24
  %vm62 = vcmp.lt.s32.totalorder %v58, 0
  %v63 = vsub.s32 0, %v58
  %v64 = vsel %vm62, %v63, %v58
  %v65 = vshrl.u32 %v64, 4
  %v66 = vand.u32 %v64, 15
  %v67 = vsub.s32 0, %v66
  %v68 = vsel %vm62, %v67, %v66
  %vm69 = vcmp.lt.s32.totalorder %v59, 0
  %v70 = vsub.s32 0, %v59
  %v71 = vsel %vm69, %v70, %v59
  %v72 = vshrl.u32 %v71, 4
  %v73 = vand.u32 %v71, 15
  %v74 = vsub.s32 0, %v73
  %v75 = vsel %vm69, %v74, %v73
  %vm76 = vcmp.lt.s32.totalorder %v60, 0
  %v77 = vsub.s32 0, %v60
  %v78 = vsel %vm76, %v77, %v60
  %v79 = vshrl.u32 %v78, 4
  %v80 = vand.u32 %v78, 15
  %v81 = vsub.s32 0, %v80
  %v82 = vsel %vm76, %v81, %v80
  %vm83 = vcmp.lt.s32.totalorder %v61, 0
  %v84 = vsub.s32 0, %v61
  %v85 = vsel %vm83, %v84, %v61
  %v86 = vshrl.u32 %v85, 4
  %v87 = vand.u32 %v85, 15
  %v88 = vsub.s32 0, %v87
  %v89 = vsel %vm83, %v88, %v87
  %vm90 = vcmp.ne.s32.totalorder %v68, 0
  %vm91 = vcmp.ne.s32.totalorder %v75, 0
  %vm92 = vcmp.ne.s32.totalorder %v82, 0
  %vm93 = vcmp.ne.s32.totalorder %v89, 0
  %vm94 = vcmp.lt.s32.totalorder %v68, 0
  %vm95 = vcmp.lt.s32.totalorder %v75, 0
  %vm96 = vcmp.lt.s32.totalorder %v82, 0
  %vm97 = vcmp.lt.s32.totalorder %v89, 0
  %vm98 = vmand %vm94, %vm90
  %vm99 = vmand %vm95, %vm91
  %vm100 = vmand %vm96, %vm92
  %vm101 = vmand %vm97, %vm93
  %v102 = vadd.s32 %v68, 16
  %v103 = vadd.s32 %v75, 16
  %v104 = vadd.s32 %v82, 16
  %v105 = vadd.s32 %v89, 16
  %v106 = vsel %vm98, %v102, %v68
  %v107 = vsel %vm99, %v103, %v75
  %v108 = vsel %vm100, %v104, %v82
  %v109 = vsel %vm101, %v105, %v89
  %vm110 = vcmp.ne.s32.totalorder %v106, 0
  %vm111 = vcmp.ne.s32.totalorder %v107, 0
  %vm112 = vcmp.ne.s32.totalorder %v108, 0
  %vm113 = vcmp.ne.s32.totalorder %v109, 0
  %v114 = vrot.slane %v53, 7
  %v115 = vrot.slane %v54, 7
  %v116 = vrot.slane %v55, 7
  %v117 = vrot.slane %v56, 7
  %vm118 = vcmp.lt.s32.totalorder %v58, 1
  %v119 = vsel %vm118, %v116, %v117
  %v120 = vsel %vm118, %v115, %v116
  %v121 = vsel %vm118, %v114, %v115
  %v122 = vsel %vm118, %v117, %v114
  %v123 = vsel %vm110, %v122, 0.0
  %v124 = vsel %vm111, %v121, 0.0
  %v125 = vsel %vm112, %v120, 0.0
  %v126 = vsel %vm113, %v119, 0.0
  %vm127 = vcmp.ne.s32.totalorder %v106, 15
  %vm128 = vcmp.ne.s32.totalorder %v107, 15
  %vm129 = vcmp.ne.s32.totalorder %v108, 15
  %vm130 = vcmp.ne.s32.totalorder %v109, 15
  %v131 = vrot.slane %v53, 1
  %v132 = vrot.slane %v54, 1
  %v133 = vrot.slane %v55, 1
  %v134 = vrot.slane %v56, 1
  %vm135 = vcmp.lt.s32.totalorder %v58, 7
  %v136 = vsel %vm135, %v133, %v134
  %v137 = vsel %vm135, %v132, %v133
  %v138 = vsel %vm135, %v131, %v132
  %v139 = vsel %vm135, %v134, %v131
  %v140 = vsel %vm127, %v138, 0.0
  %v141 = vsel %vm128, %v137, 0.0
  %v142 = vsel %vm129, %v136, 0.0
  %v143 = vsel %vm130, %v139, 0.0
  %v144 = vpack.c.bf16 %v124, %v123
  %v145 = vpack.c.bf16 %v126, %v125
  %v146 = vld [vmem:[%s1] sm:$0xf]
  %v147 = vld [vmem:[%s1 + $0x4] sm:$0xf]
  %v148 = vld [vmem:[%s1 + $0x8] sm:$0xf]
  %v149 = vld [vmem:[%s1 + $0xc] sm:$0xf]
  %v150 = vld [vmem:[%s1 + $0x10] sm:$0xf]
  %v151 = vld [vmem:[%s1 + $0x14] sm:$0xf]
  %v152 = vld [vmem:[%s1 + $0x18] sm:$0xf]
  %v153 = vld [vmem:[%s1 + $0x1c] sm:$0xf]
  %v154 = vld [vmem:[%s1 + $0x20] sm:$0xf]
  %v155 = vld [vmem:[%s1 + $0x24] sm:$0xf]
  %v156 = vld [vmem:[%s1 + $0x28] sm:$0xf]
  %v157 = vld [vmem:[%s1 + $0x2c] sm:$0xf]
  %v158 = vld [vmem:[%s1 + $0x30] sm:$0xf]
  %v159 = vld [vmem:[%s1 + $0x34] sm:$0xf]
  %v160 = vld [vmem:[%s1 + $0x38] sm:$0xf]
  %v161 = vld [vmem:[%s1 + $0x3c] sm:$0xf]
  %v162 = vpack.c.bf16 %v54, %v53
  %v163 = vpack.c.bf16 %v56, %v55
  %s164 = scalar_lea.vmem %s1, 64
  %v165 = vld [vmem:[%s164] sm:$0xf]
  %v166 = vld [vmem:[%s164 + $0x4] sm:$0xf]
  %v167 = vld [vmem:[%s164 + $0x8] sm:$0xf]
  %v168 = vld [vmem:[%s164 + $0xc] sm:$0xf]
  %v169 = vld [vmem:[%s164 + $0x10] sm:$0xf]
  %v170 = vld [vmem:[%s164 + $0x14] sm:$0xf]
  %v171 = vld [vmem:[%s164 + $0x18] sm:$0xf]
  %v172 = vld [vmem:[%s164 + $0x1c] sm:$0xf]
  %v173 = vld [vmem:[%s164 + $0x20] sm:$0xf]
  %v174 = vld [vmem:[%s164 + $0x24] sm:$0xf]
  %v175 = vld [vmem:[%s164 + $0x28] sm:$0xf]
  %v176 = vld [vmem:[%s164 + $0x2c] sm:$0xf]
  %v177 = vld [vmem:[%s164 + $0x30] sm:$0xf]
  %v178 = vld [vmem:[%s164 + $0x34] sm:$0xf]
  %v179 = vld [vmem:[%s164 + $0x38] sm:$0xf]
  %v180 = vld [vmem:[%s164 + $0x3c] sm:$0xf]
  %v197 = vunpack.c.l.b16 %v165
  %v198 = vunpack.c.l.b16 %v166
  %v199 = vunpack.c.l.b16 %v167
  %v200 = vunpack.c.l.b16 %v168
  %v201 = vunpack.c.l.b16 %v169
  %v202 = vunpack.c.l.b16 %v170
  %v203 = vunpack.c.l.b16 %v171
  %v204 = vunpack.c.l.b16 %v172
  %v205 = vunpack.c.l.b16 %v173
  %v206 = vunpack.c.l.b16 %v174
  %v207 = vunpack.c.l.b16 %v175
  %v208 = vunpack.c.l.b16 %v176
  %v209 = vunpack.c.l.b16 %v177
  %v210 = vunpack.c.l.b16 %v178
  %v211 = vunpack.c.l.b16 %v179
  %v212 = vunpack.c.l.b16 %v180
  %v213 = vpack.c.b16 %v198, %v197
  %v214 = vpack.c.b16 %v200, %v199
  %v215 = vpack.c.b16 %v202, %v201
  %v216 = vpack.c.b16 %v204, %v203
  %v217 = vpack.c.b16 %v206, %v205
  %v218 = vpack.c.b16 %v208, %v207
  %v219 = vpack.c.b16 %v210, %v209
  %v220 = vpack.c.b16 %v212, %v211
  %229 = vmatprep.subr.bf16.mxu0 0
  %230 = vmatpush1.bf16.msra.mxu0 %v213
  %231 = vmatprep.subr.bf16.mxu0 0
  %232 = vmatpush1.bf16.msra.mxu0 %v214
  %233 = vmatprep.subr.bf16.mxu0 0
  %234 = vmatpush1.bf16.msra.mxu0 %v215
  %235 = vmatprep.subr.bf16.mxu0 0
  %236 = vmatpush1.bf16.msra.mxu0 %v216
  %237 = vmatprep.subr.bf16.mxu0 0
  %238 = vmatpush1.bf16.msra.mxu0 %v217
  %239 = vmatprep.subr.bf16.mxu0 0
  %240 = vmatpush1.bf16.msra.mxu0 %v218
  %241 = vmatprep.subr.bf16.mxu0 0
  %242 = vmatpush1.bf16.msra.mxu0 %v219
  %243 = vmatprep.subr.bf16.mxu0 0
  %244 = vmatpush1.bf16.msra.mxu0 %v220
  %245 = vmatprep.subr.bf16.mxu0 0
  %246 = vmatpush1.bf16.msra.mxu0 0
  %247 = vmatprep.subr.bf16.mxu0 0
  %248 = vmatpush1.bf16.msra.mxu0 0
  %249 = vmatprep.subr.bf16.mxu0 0
  %250 = vmatpush1.bf16.msra.mxu0 0
  %251 = vmatprep.subr.bf16.mxu0 0
  %252 = vmatpush1.bf16.msra.mxu0 0
  %253 = vmatprep.subr.bf16.mxu0 0
  %254 = vmatpush1.bf16.msra.mxu0 0
  %255 = vmatprep.subr.bf16.mxu0 0
  %256 = vmatpush1.bf16.msra.mxu0 0
  %257 = vmatprep.subr.bf16.mxu0 0
  %258 = vmatpush1.bf16.msra.mxu0 0
  %259 = vmatprep.subr.bf16.mxu0 0
  %260 = vmatpush1.bf16.msra.mxu0 0
  %261 = vmatprep.mubr.bf16.mxu0 0
  %262 = vmatmul.mubr.bf16.gmra.mrb[0].mxu0 %v162
  %v263 = vpop.f32.mrb[0].mxu0
  %v264 = vadd.f32 0.0, %v263
  %v265 = vpop.f32.mrb[0].mxu0
  %v266 = vpop.f32.mrb[0].mxu0
  %v267 = vadd.f32 0.0, %v266
  %v268 = vpop.f32.mrb[0].mxu0
  %269 = vmatprep.mubr.bf16.mxu0 0
  %270 = vmatmul.mubr.bf16.gmra.mrb[0].mxu0 %v163
  %v271 = vpop.f32.mrb[0].mxu0
  %v272 = vadd.f32 0.0, %v271
  %v273 = vpop.f32.mrb[0].mxu0
  %v274 = vpop.f32.mrb[0].mxu0
  %v275 = vadd.f32 0.0, %v274
  %v276 = vpop.f32.mrb[0].mxu0
  %277 = vdwg.mxu0
  %v294 = vunpack.c.l.b16 %v146
  %v295 = vunpack.c.l.b16 %v147
  %v296 = vunpack.c.l.b16 %v148
  %v297 = vunpack.c.l.b16 %v149
  %v298 = vunpack.c.l.b16 %v150
  %v299 = vunpack.c.l.b16 %v151
  %v300 = vunpack.c.l.b16 %v152
  %v301 = vunpack.c.l.b16 %v153
  %v302 = vunpack.c.l.b16 %v154
  %v303 = vunpack.c.l.b16 %v155
  %v304 = vunpack.c.l.b16 %v156
  %v305 = vunpack.c.l.b16 %v157
  %v306 = vunpack.c.l.b16 %v158
  %v307 = vunpack.c.l.b16 %v159
  %v308 = vunpack.c.l.b16 %v160
  %v309 = vunpack.c.l.b16 %v161
  %v310 = vpack.c.b16 %v295, %v294
  %v311 = vpack.c.b16 %v297, %v296
  %v312 = vpack.c.b16 %v299, %v298
  %v313 = vpack.c.b16 %v301, %v300
  %v314 = vpack.c.b16 %v303, %v302
  %v315 = vpack.c.b16 %v305, %v304
  %v316 = vpack.c.b16 %v307, %v306
  %v317 = vpack.c.b16 %v309, %v308
  %326 = vmatprep.subr.bf16.mxu0 0
  %327 = vmatpush1.bf16.msra.mxu0 %v310
  %328 = vmatprep.subr.bf16.mxu0 0
  %329 = vmatpush1.bf16.msra.mxu0 %v311
  %330 = vmatprep.subr.bf16.mxu0 0
  %331 = vmatpush1.bf16.msra.mxu0 %v312
  %332 = vmatprep.subr.bf16.mxu0 0
  %333 = vmatpush1.bf16.msra.mxu0 %v313
  %334 = vmatprep.subr.bf16.mxu0 0
  %335 = vmatpush1.bf16.msra.mxu0 %v314
  %336 = vmatprep.subr.bf16.mxu0 0
  %337 = vmatpush1.bf16.msra.mxu0 %v315
  %338 = vmatprep.subr.bf16.mxu0 0
  %339 = vmatpush1.bf16.msra.mxu0 %v316
  %340 = vmatprep.subr.bf16.mxu0 0
  %341 = vmatpush1.bf16.msra.mxu0 %v317
  %342 = vmatprep.subr.bf16.mxu0 0
  %343 = vmatpush1.bf16.msra.mxu0 0
  %344 = vmatprep.subr.bf16.mxu0 0
  %345 = vmatpush1.bf16.msra.mxu0 0
  %346 = vmatprep.subr.bf16.mxu0 0
  %347 = vmatpush1.bf16.msra.mxu0 0
  %348 = vmatprep.subr.bf16.mxu0 0
  %349 = vmatpush1.bf16.msra.mxu0 0
  %350 = vmatprep.subr.bf16.mxu0 0
  %351 = vmatpush1.bf16.msra.mxu0 0
  %352 = vmatprep.subr.bf16.mxu0 0
  %353 = vmatpush1.bf16.msra.mxu0 0
  %354 = vmatprep.subr.bf16.mxu0 0
  %355 = vmatpush1.bf16.msra.mxu0 0
  %356 = vmatprep.subr.bf16.mxu0 0
  %357 = vmatpush1.bf16.msra.mxu0 0
  %358 = vmatprep.mubr.bf16.mxu0 0
  %359 = vmatmul.mubr.bf16.gmra.mrb[0].mxu0 %v144
  %v360 = vpop.f32.mrb[0].mxu0
  %v361 = vadd.f32 %v264, %v360
  %v362 = vpop.f32.mrb[0].mxu0
  %v363 = vpop.f32.mrb[0].mxu0
  %v364 = vadd.f32 %v267, %v363
  %v365 = vpop.f32.mrb[0].mxu0
  %366 = vmatprep.mubr.bf16.mxu0 0
  %367 = vmatmul.mubr.bf16.gmra.mrb[0].mxu0 %v145
  %v368 = vpop.f32.mrb[0].mxu0
  %v369 = vadd.f32 %v272, %v368
  %v370 = vpop.f32.mrb[0].mxu0
  %v371 = vpop.f32.mrb[0].mxu0
  %v372 = vadd.f32 %v275, %v371
  %v373 = vpop.f32.mrb[0].mxu0
  %374 = vdwg.mxu0
  %v375 = vpack.c.bf16 %v141, %v140
  %v376 = vpack.c.bf16 %v143, %v142
  %s377 = scalar_lea.vmem %s1, 128
  %v378 = vld [vmem:[%s377] sm:$0xf]
  %v379 = vld [vmem:[%s377 + $0x4] sm:$0xf]
  %v380 = vld [vmem:[%s377 + $0x8] sm:$0xf]
  %v381 = vld [vmem:[%s377 + $0xc] sm:$0xf]
  %v382 = vld [vmem:[%s377 + $0x10] sm:$0xf]
  %v383 = vld [vmem:[%s377 + $0x14] sm:$0xf]
  %v384 = vld [vmem:[%s377 + $0x18] sm:$0xf]
  %v385 = vld [vmem:[%s377 + $0x1c] sm:$0xf]
  %v386 = vld [vmem:[%s377 + $0x20] sm:$0xf]
  %v387 = vld [vmem:[%s377 + $0x24] sm:$0xf]
  %v388 = vld [vmem:[%s377 + $0x28] sm:$0xf]
  %v389 = vld [vmem:[%s377 + $0x2c] sm:$0xf]
  %v390 = vld [vmem:[%s377 + $0x30] sm:$0xf]
  %v391 = vld [vmem:[%s377 + $0x34] sm:$0xf]
  %v392 = vld [vmem:[%s377 + $0x38] sm:$0xf]
  %v393 = vld [vmem:[%s377 + $0x3c] sm:$0xf]
  %v410 = vunpack.c.l.b16 %v378
  %v411 = vunpack.c.l.b16 %v379
  %v412 = vunpack.c.l.b16 %v380
  %v413 = vunpack.c.l.b16 %v381
  %v414 = vunpack.c.l.b16 %v382
  %v415 = vunpack.c.l.b16 %v383
  %v416 = vunpack.c.l.b16 %v384
  %v417 = vunpack.c.l.b16 %v385
  %v418 = vunpack.c.l.b16 %v386
  %v419 = vunpack.c.l.b16 %v387
  %v420 = vunpack.c.l.b16 %v388
  %v421 = vunpack.c.l.b16 %v389
  %v422 = vunpack.c.l.b16 %v390
  %v423 = vunpack.c.l.b16 %v391
  %v424 = vunpack.c.l.b16 %v392
  %v425 = vunpack.c.l.b16 %v393
  %v426 = vpack.c.b16 %v411, %v410
  %v427 = vpack.c.b16 %v413, %v412
  %v428 = vpack.c.b16 %v415, %v414
  %v429 = vpack.c.b16 %v417, %v416
  %v430 = vpack.c.b16 %v419, %v418
  %v431 = vpack.c.b16 %v421, %v420
  %v432 = vpack.c.b16 %v423, %v422
  %v433 = vpack.c.b16 %v425, %v424
  %442 = vmatprep.subr.bf16.mxu0 0
  %443 = vmatpush1.bf16.msra.mxu0 %v426
  %444 = vmatprep.subr.bf16.mxu0 0
  %445 = vmatpush1.bf16.msra.mxu0 %v427
  %446 = vmatprep.subr.bf16.mxu0 0
  %447 = vmatpush1.bf16.msra.mxu0 %v428
  %448 = vmatprep.subr.bf16.mxu0 0
  %449 = vmatpush1.bf16.msra.mxu0 %v429
  %450 = vmatprep.subr.bf16.mxu0 0
  %451 = vmatpush1.bf16.msra.mxu0 %v430
  %452 = vmatprep.subr.bf16.mxu0 0
  %453 = vmatpush1.bf16.msra.mxu0 %v431
  %454 = vmatprep.subr.bf16.mxu0 0
  %455 = vmatpush1.bf16.msra.mxu0 %v432
  %456 = vmatprep.subr.bf16.mxu0 0
  %457 = vmatpush1.bf16.msra.mxu0 %v433
  %458 = vmatprep.subr.bf16.mxu0 0
  %459 = vmatpush1.bf16.msra.mxu0 0
  %460 = vmatprep.subr.bf16.mxu0 0
  %461 = vmatpush1.bf16.msra.mxu0 0
  %462 = vmatprep.subr.bf16.mxu0 0
  %463 = vmatpush1.bf16.msra.mxu0 0
  %464 = vmatprep.subr.bf16.mxu0 0
  %465 = vmatpush1.bf16.msra.mxu0 0
  %466 = vmatprep.subr.bf16.mxu0 0
  %467 = vmatpush1.bf16.msra.mxu0 0
  %468 = vmatprep.subr.bf16.mxu0 0
  %469 = vmatpush1.bf16.msra.mxu0 0
  %470 = vmatprep.subr.bf16.mxu0 0
  %471 = vmatpush1.bf16.msra.mxu0 0
  %472 = vmatprep.subr.bf16.mxu0 0
  %473 = vmatpush1.bf16.msra.mxu0 0
  %474 = vmatprep.mubr.bf16.mxu0 0
  %475 = vmatmul.mubr.bf16.gmra.mrb[0].mxu0 %v375
  %v476 = vpop.f32.mrb[0].mxu0
  %v477 = vadd.f32 0.0, %v476
  %v478 = vpop.f32.mrb[0].mxu0
  %v479 = vpop.f32.mrb[0].mxu0
  %v480 = vadd.f32 0.0, %v479
  %v481 = vpop.f32.mrb[0].mxu0
  %482 = vmatprep.mubr.bf16.mxu0 0
  %483 = vmatmul.mubr.bf16.gmra.mrb[0].mxu0 %v376
  %v484 = vpop.f32.mrb[0].mxu0
  %v485 = vadd.f32 0.0, %v484
  %v486 = vpop.f32.mrb[0].mxu0
  %v487 = vpop.f32.mrb[0].mxu0
  %v488 = vadd.f32 0.0, %v487
  %v489 = vpop.f32.mrb[0].mxu0
  %490 = vdwg.mxu0
  %v491 = vadd.f32 %v361, %v477
  %v492 = vadd.f32 %v364, %v480
  %v493 = vadd.f32 %v369, %v485
  %v494 = vadd.f32 %v372, %v488
  %495 = vst [vmem:[%s5] sm:$0xff] %v491
  %496 = vst [vmem:[%s5 + $0x8] sm:$0xff] %v492
  %497 = vst [vmem:[%s5 + $0x10] sm:$0xff] %v493
  %498 = vst [vmem:[%s5 + $0x18] sm:$0xff] %v494
  %v499 = vld [vmem:[%s2] sm:$0xff]
  %v500 = vld [vmem:[%s2 + $0x8] sm:$0xff]
  %v501 = vld [vmem:[%s2 + $0x10] sm:$0xff]
  %v502 = vld [vmem:[%s2 + $0x18] sm:$0xff]
  %v503 = vld [vmem:[%s2 + $0x20] sm:$0xff]
  %v504 = vld [vmem:[%s2 + $0x28] sm:$0xff]
  %v505 = vld [vmem:[%s2 + $0x30] sm:$0xff]
  %v506 = vld [vmem:[%s2 + $0x38] sm:$0xff]
  %v507 = vld [vmem:[%s2 + $0x40] sm:$0xff]
  %v508 = vld [vmem:[%s2 + $0x48] sm:$0xff]
  %v509 = vld [vmem:[%s2 + $0x50] sm:$0xff]
  %v510 = vld [vmem:[%s2 + $0x58] sm:$0xff]
  %v511 = vld [vmem:[%s2 + $0x60] sm:$0xff]
  %v512 = vld [vmem:[%s2 + $0x68] sm:$0xff]
  %v513 = vld [vmem:[%s2 + $0x70] sm:$0xff]
  %v514 = vld [vmem:[%s2 + $0x78] sm:$0xff]
  %515 = vmatprep.subr.mxu0 0.0
  %516 = vmatpush1.msra.mxu0 %v499
  %517 = vmatprep.subr.mxu0 0.0
  %518 = vmatpush1.msra.mxu0 %v500
  %519 = vmatprep.subr.mxu0 0.0
  %520 = vmatpush1.msra.mxu0 %v501
  %521 = vmatprep.subr.mxu0 0.0
  %522 = vmatpush1.msra.mxu0 %v502
  %523 = vmatprep.subr.mxu0 0.0
  %524 = vmatpush1.msra.mxu0 %v503
  %525 = vmatprep.subr.mxu0 0.0
  %526 = vmatpush1.msra.mxu0 %v504
  %527 = vmatprep.subr.mxu0 0.0
  %528 = vmatpush1.msra.mxu0 %v505
  %529 = vmatprep.subr.mxu0 0.0
  %530 = vmatpush1.msra.mxu0 %v506
  %531 = vmatprep.subr.mxu0 0.0
  %532 = vmatpush1.msra.mxu0 %v507
  %533 = vmatprep.subr.mxu0 0.0
  %534 = vmatpush1.msra.mxu0 %v508
  %535 = vmatprep.subr.mxu0 0.0
  %536 = vmatpush1.msra.mxu0 %v509
  %537 = vmatprep.subr.mxu0 0.0
  %538 = vmatpush1.msra.mxu0 %v510
  %539 = vmatprep.subr.mxu0 0.0
  %540 = vmatpush1.msra.mxu0 %v511
  %541 = vmatprep.subr.mxu0 0.0
  %542 = vmatpush1.msra.mxu0 %v512
  %543 = vmatprep.subr.mxu0 0.0
  %544 = vmatpush1.msra.mxu0 %v513
  %545 = vmatprep.subr.mxu0 0.0
  %546 = vmatpush1.msra.mxu0 %v514
  %547 = vmatprep.subr.mxu0 0.0
  %548 = vmatpush1.msra.mxu0 0.0
  %549 = vmatprep.subr.mxu0 0.0
  %550 = vmatpush1.msra.mxu0 0.0
  %551 = vmatprep.subr.mxu0 0.0
  %552 = vmatpush1.msra.mxu0 0.0
  %553 = vmatprep.subr.mxu0 0.0
  %554 = vmatpush1.msra.mxu0 0.0
  %555 = vmatprep.subr.mxu0 0.0
  %556 = vmatpush1.msra.mxu0 0.0
  %557 = vmatprep.subr.mxu0 0.0
  %558 = vmatpush1.msra.mxu0 0.0
  %559 = vmatprep.subr.mxu0 0.0
  %560 = vmatpush1.msra.mxu0 0.0
  %561 = vmatprep.subr.mxu0 0.0
  %562 = vmatpush1.msra.mxu0 0.0
  %563 = vmatprep.subr.mxu0 0.0
  %564 = vmatpush1.msra.mxu0 0.0
  %565 = vmatprep.subr.mxu0 0.0
  %566 = vmatpush1.msra.mxu0 0.0
  %567 = vmatprep.subr.mxu0 0.0
  %568 = vmatpush1.msra.mxu0 0.0
  %569 = vmatprep.subr.mxu0 0.0
  %570 = vmatpush1.msra.mxu0 0.0
  %571 = vmatprep.subr.mxu0 0.0
  %572 = vmatpush1.msra.mxu0 0.0
  %573 = vmatprep.subr.mxu0 0.0
  %574 = vmatpush1.msra.mxu0 0.0
  %575 = vmatprep.subr.mxu0 0.0
  %576 = vmatpush1.msra.mxu0 0.0
  %577 = vmatprep.subr.mxu0 0.0
  %578 = vmatpush1.msra.mxu0 0.0
  %579 = vmatprep.mubr.f32.mxu0 0.0
  %580 = vmatmul.mubr.f32.gmra.mrb[0].mxu0 %v491
  %v581 = vpop.f32.mrb[0].mxu0
  %v582 = vadd.f32 0.0, %v581
  %v583 = vpop.f32.mrb[0].mxu0
  %584 = vmatprep.mubr.f32.mxu0 0.0
  %585 = vmatmul.mubr.f32.gmra.mrb[0].mxu0 %v492
  %v586 = vpop.f32.mrb[0].mxu0
  %v587 = vadd.f32 0.0, %v586
  %v588 = vpop.f32.mrb[0].mxu0
  %589 = vmatprep.mubr.f32.mxu0 0.0
  %590 = vmatmul.mubr.f32.gmra.mrb[0].mxu0 %v493
  %v591 = vpop.f32.mrb[0].mxu0
  %v592 = vadd.f32 0.0, %v591
  %v593 = vpop.f32.mrb[0].mxu0
  %594 = vmatprep.mubr.f32.mxu0 0.0
  %595 = vmatmul.mubr.f32.gmra.mrb[0].mxu0 %v494
  %v596 = vpop.f32.mrb[0].mxu0
  %v597 = vadd.f32 0.0, %v596
  %v598 = vpop.f32.mrb[0].mxu0
  %599 = vdwg.mxu0
  %v600 = vadd.f32 %v582, %v587
  %v601 = vadd.f32 %v600, %v592
  %v602 = vadd.f32 %v601, %v597
  %v603 = vrot.slane %v602, 4
  %v604 = vadd.f32 %v602, %v603
  %v605 = vrot.slane %v604, 2
  %v606 = vadd.f32 %v604, %v605
  %v607 = vrot.slane %v606, 1
  %v608 = vadd.f32 %v606, %v607
  %v609 = vmul.f32 %v491, %v491
  %v610 = vmul.f32 %v492, %v492
  %v611 = vmul.f32 %v493, %v493
  %v612 = vmul.f32 %v494, %v494
  %613 = vmatprep.subr.mxu0 0.0
  %614 = vmatpush1.msra.mxu0 %v499
  %615 = vmatprep.subr.mxu0 0.0
  %616 = vmatpush1.msra.mxu0 %v500
  %617 = vmatprep.subr.mxu0 0.0
  %618 = vmatpush1.msra.mxu0 %v501
  %619 = vmatprep.subr.mxu0 0.0
  %620 = vmatpush1.msra.mxu0 %v502
  %621 = vmatprep.subr.mxu0 0.0
  %622 = vmatpush1.msra.mxu0 %v503
  %623 = vmatprep.subr.mxu0 0.0
  %624 = vmatpush1.msra.mxu0 %v504
  %625 = vmatprep.subr.mxu0 0.0
  %626 = vmatpush1.msra.mxu0 %v505
  %627 = vmatprep.subr.mxu0 0.0
  %628 = vmatpush1.msra.mxu0 %v506
  %629 = vmatprep.subr.mxu0 0.0
  %630 = vmatpush1.msra.mxu0 %v507
  %631 = vmatprep.subr.mxu0 0.0
  %632 = vmatpush1.msra.mxu0 %v508
  %633 = vmatprep.subr.mxu0 0.0
  %634 = vmatpush1.msra.mxu0 %v509
  %635 = vmatprep.subr.mxu0 0.0
  %636 = vmatpush1.msra.mxu0 %v510
  %637 = vmatprep.subr.mxu0 0.0
  %638 = vmatpush1.msra.mxu0 %v511
  %639 = vmatprep.subr.mxu0 0.0
  %640 = vmatpush1.msra.mxu0 %v512
  %641 = vmatprep.subr.mxu0 0.0
  %642 = vmatpush1.msra.mxu0 %v513
  %643 = vmatprep.subr.mxu0 0.0
  %644 = vmatpush1.msra.mxu0 %v514
  %645 = vmatprep.subr.mxu0 0.0
  %646 = vmatpush1.msra.mxu0 0.0
  %647 = vmatprep.subr.mxu0 0.0
  %648 = vmatpush1.msra.mxu0 0.0
  %649 = vmatprep.subr.mxu0 0.0
  %650 = vmatpush1.msra.mxu0 0.0
  %651 = vmatprep.subr.mxu0 0.0
  %652 = vmatpush1.msra.mxu0 0.0
  %653 = vmatprep.subr.mxu0 0.0
  %654 = vmatpush1.msra.mxu0 0.0
  %655 = vmatprep.subr.mxu0 0.0
  %656 = vmatpush1.msra.mxu0 0.0
  %657 = vmatprep.subr.mxu0 0.0
  %658 = vmatpush1.msra.mxu0 0.0
  %659 = vmatprep.subr.mxu0 0.0
  %660 = vmatpush1.msra.mxu0 0.0
  %661 = vmatprep.subr.mxu0 0.0
  %662 = vmatpush1.msra.mxu0 0.0
  %663 = vmatprep.subr.mxu0 0.0
  %664 = vmatpush1.msra.mxu0 0.0
  %665 = vmatprep.subr.mxu0 0.0
  %666 = vmatpush1.msra.mxu0 0.0
  %667 = vmatprep.subr.mxu0 0.0
  %668 = vmatpush1.msra.mxu0 0.0
  %669 = vmatprep.subr.mxu0 0.0
  %670 = vmatpush1.msra.mxu0 0.0
  %671 = vmatprep.subr.mxu0 0.0
  %672 = vmatpush1.msra.mxu0 0.0
  %673 = vmatprep.subr.mxu0 0.0
  %674 = vmatpush1.msra.mxu0 0.0
  %675 = vmatprep.subr.mxu0 0.0
  %676 = vmatpush1.msra.mxu0 0.0
  %677 = vmatprep.mubr.f32.mxu0 0.0
  %678 = vmatmul.mubr.f32.gmra.mrb[0].mxu0 %v609
  %v679 = vpop.f32.mrb[0].mxu0
  %v680 = vadd.f32 0.0, %v679
  %v681 = vpop.f32.mrb[0].mxu0
  %682 = vmatprep.mubr.f32.mxu0 0.0
  %683 = vmatmul.mubr.f32.gmra.mrb[0].mxu0 %v610
  %v684 = vpop.f32.mrb[0].mxu0
  %v685 = vadd.f32 0.0, %v684
  %v686 = vpop.f32.mrb[0].mxu0
  %687 = vmatprep.mubr.f32.mxu0 0.0
  %688 = vmatmul.mubr.f32.gmra.mrb[0].mxu0 %v611
  %v689 = vpop.f32.mrb[0].mxu0
  %v690 = vadd.f32 0.0, %v689
  %v691 = vpop.f32.mrb[0].mxu0
  %692 = vmatprep.mubr.f32.mxu0 0.0
  %693 = vmatmul.mubr.f32.gmra.mrb[0].mxu0 %v612
  %v694 = vpop.f32.mrb[0].mxu0
  %v695 = vadd.f32 0.0, %v694
  %v696 = vpop.f32.mrb[0].mxu0
  %697 = vdwg.mxu0
  %v698 = vadd.f32 %v680, %v685
  %v699 = vadd.f32 %v698, %v690
  %v700 = vadd.f32 %v699, %v695
  %v701 = vrot.slane %v700, 4
  %v702 = vadd.f32 %v700, %v701
  %v703 = vrot.slane %v702, 2
  %v704 = vadd.f32 %v702, %v703
  %v705 = vrot.slane %v704, 1
  %v706 = vadd.f32 %v704, %v705
  %vm707 = vcmask 1040384
  %v708 = vsel %vm707, %v608, %v706
  %709 = vst [vmem:[%s6] sm:$0x3] %v708
  // Predicated region
  $region22: #{double_conv_forward.3} parent=0 // pred_check
    _
  $region23: #{double_conv_forward.3} parent=0 // pred_check_branch
    %711 = sbr.rel (0) target = $region25
  $region24: #{double_conv_forward.3} parent=0 // pred_region
    _
  $region25: #{double_conv_forward.3} parent=0 // pred_fallthru
    _
  // Predicated region
  $region26: #{double_conv_forward.3} parent=0 // pred_check
    _
  $region27: #{double_conv_forward.3} parent=0 // pred_check_branch
    %713 = sbr.rel (0) target = $region29
  $region28: #{double_conv_forward.3} parent=0 // pred_region
    _
  $region29: #{double_conv_forward.3} parent=0 // pred_fallthru
    _
  // Predicated region
  $region30: #{double_conv_forward.3} parent=0 // pred_check
    _
  $region31: #{double_conv_forward.3} parent=0 // pred_check_branch
    %715 = sbr.rel (0) target = $region33
  $region32: #{double_conv_forward.3} parent=0 // pred_region
    _
  $region33: #{double_conv_forward.3} parent=0 // pred_fallthru
    _
  // Predicated region
  $region34: #{double_conv_forward.3} parent=0 // pred_check
    _
  $region35: #{double_conv_forward.3} parent=0 // pred_check_branch
    %717 = sbr.rel (0) target = $region37
  $region36: #{double_conv_forward.3} parent=0 // pred_region
    _
  $region37: #{double_conv_forward.3} parent=0 // pred_fallthru
    _

</llo_original>
